<compile_context>
chip_gen: v7x
topology: tpu7x:2x2x1
jax: 0.10.0
libtpu: 0.0.40
codegen_flags: <defaults>
</compile_context>

<pallas_src>
import functools

import jax
import jax.numpy as jnp
import numpy as np
from jax.experimental import pallas as pl
from jax.experimental.pallas import tpu as pltpu


# ----------------------------------------------------------------------------
# Pallas kernel: whole Wavenet stack for ONE batch example per grid step.
# All activations are (channels, time) = (sublanes, lanes).
# ----------------------------------------------------------------------------
def wavenet_kernel(x_ref, ws_ref, bs_ref, wc_ref, bc_ref, wrk_ref, brk_ref,
                   wa_ref, ba_ref, wb_ref, bb_ref, out_ref, hbuf_ref,
                   *, dilations, n_chans, n_chans_res, matmul_dtype):
    Cin, W = x_ref.shape                  # batch dim squeezed by the BlockSpec
    Cc = n_chans
    R = n_chans_res
    pad = hbuf_ref.shape[1] - W           # = max(dilations): causal halo width

    x = x_ref[...]                        # (Cin, W)

    def shift_right(a, s):
        # y[:, t] = a[:, t-s], zeros for t < s.  Only used for the tiny
        # (Cin, W) network input; the residual stream uses the halo scratch.
        z = jnp.zeros((a.shape[0], s), a.dtype)
        return jnp.concatenate([z, a[:, :W - s]], axis=1)

    # ShiftedCausal1d (k=2): h[t] = W0 @ x[t-2] + W1 @ x[t-1] + b.
    # Contraction depth is only 2*Cin -> VPU broadcast FMAs, not the MXU.
    sh2 = shift_right(x, 2)
    sh1 = shift_right(x, 1)
    ws = ws_ref[...]                      # (Cc, 2*Cin): [tap@t-2 | tap@t-1]
    h = sh2[0:1, :] * ws[:, 0:1] + sh1[0:1, :] * ws[:, Cin:Cin + 1]
    for c in range(1, Cin):               # Cin is tiny (mono/stereo)
        h = h + sh2[c:c + 1, :] * ws[:, c:c + 1]
        h = h + sh1[c:c + 1, :] * ws[:, Cin + c:Cin + c + 1]
    h = jnp.maximum(h + bs_ref[...], 0.0)                      # (Cc, W), ReLU

    # Left causal halo == the zero padding of every Causal1d in the stack.
    hbuf_ref[:, :pad] = jnp.zeros((Cc, pad), jnp.float32)

    S = wrk_ref.shape[1] - Cc
    skips = jnp.zeros((S, W), jnp.float32)

    for i, d in enumerate(dilations):     # static unroll (L = 3 here)
        # Stash the current residual stream next to its zero halo; the causal
        # shift by d is then a static windowed load (no roll, no mask).
        hbuf_ref[:, pad:] = h
        h_shift = hbuf_ref[:, pl.ds(pad - d, W)]               # h[:, t - d]
        # Causal1d(k=2, dil=d): both taps fused into ONE (2R,2Cc)@(2Cc,W).
        hcat = jnp.concatenate([h_shift, h], axis=0).astype(matmul_dtype)
        pre = (jnp.dot(wc_ref[i].astype(matmul_dtype), hcat,
                       preferred_element_type=jnp.float32) + bc_ref[i])
        # GLU along channels (sublane-tile-aligned split at R=32).
        gated = pre[:R] * jax.nn.sigmoid(pre[R:])
        # Fused res1x1 + skip1x1: one (Cc+S, R) @ (R, W) matmul.
        rs = (jnp.dot(wrk_ref[i].astype(matmul_dtype),
                      gated.astype(matmul_dtype),
                      preferred_element_type=jnp.float32) + brk_ref[i])
        h = rs[:Cc] + h                                        # residual
        skips = skips + rs[Cc:]                                # skip accum

    s = jnp.maximum(skips, 0.0).astype(matmul_dtype)
    e = jnp.maximum(
        jnp.dot(wa_ref[...].astype(matmul_dtype), s,
                preferred_element_type=jnp.float32) + ba_ref[...], 0.0)
    logits = (jnp.dot(wb_ref[...].astype(matmul_dtype), e.astype(matmul_dtype),
                      preferred_element_type=jnp.float32) + bb_ref[...])

    out_ref[...] = logits.astype(out_ref.dtype)   # (n_logits, W), lane-dense


def wavenet_pallas(x_ncw, kparams, *, dilations, cfg,
                   matmul_dtype=jnp.float32):
    """x_ncw: (N, C, W) float32 -> logits (N, n_classes, n_audio_chans, W).

    Set matmul_dtype=jnp.bfloat16 on v6e/v7x for ~2x MXU throughput (keeps f32
    accumulation; loosen correctness tolerance to ~1e-2).
    """
    N, Cin, W = x_ncw.shape
    n_logits = cfg["n_classes"] * cfg["n_audio_chans"]
    Cc = cfg["n_chans"]
    pad = max(dilations) * (cfg["kernel_size"] - 1)   # causal halo width

    weights = [kparams[k] for k in
               ("ws", "bs", "wc", "bc", "wrk", "brk", "wa", "ba", "wb", "bb")]

    def const_spec(arr):
        # Full-array block, constant index map -> fetched once, stays resident.
        zeros = (0,) * arr.ndim
        return pl.BlockSpec(arr.shape, lambda n, _z=zeros: _z)

    # Batch dim squeezed (None) -> kernel sees (Cin, W) / (n_logits, W) with
    # channels on sublanes and time on lanes; no wrapper-side transposes.
    in_specs = ([pl.BlockSpec((None, Cin, W), lambda n: (n, 0, 0))]
                + [const_spec(w) for w in weights])
    out_spec = pl.BlockSpec((None, n_logits, W), lambda n: (n, 0, 0))

    kernel = functools.partial(wavenet_kernel,
                               dilations=tuple(dilations),
                               n_chans=Cc,
                               n_chans_res=cfg["n_chans_res"],
                               matmul_dtype=matmul_dtype)

    out = pl.pallas_call(
        kernel,
        out_shape=jax.ShapeDtypeStruct((N, n_logits, W), jnp.float32),
        grid=(N,),
        in_specs=in_specs,
        out_specs=out_spec,
        scratch_shapes=[pltpu.VMEM((Cc, pad + W), jnp.float32)],  # h + halo
        compiler_params=pltpu.CompilerParams(
            dimension_semantics=("parallel",),
            vmem_limit_bytes=48 * 1024 * 1024),   # headroom under v7x's 64 MiB
    )(x_ncw, *weights)

    # (N, n_logits, W) -> (N, n_classes, n_audio_chans, W): free metadata view.
    return out.reshape(N, cfg["n_classes"], cfg["n_audio_chans"], W)


# ----------------------------------------------------------------------------
# Pure-JAX reference mirroring the PyTorch module (for correctness check).
# ----------------------------------------------------------------------------
def _torch_conv1d(x, w, b, dilation, left_pad):
    # x: (N, Cin, W), w: (Cout, Cin, K) (PyTorch layout), b: (Cout,)
    xp = jnp.pad(x, ((0, 0), (0, 0), (left_pad, 0)))
    y = jax.lax.conv_general_dilated(
        xp, w, window_strides=(1,), padding="VALID",
        rhs_dilation=(dilation,), dimension_numbers=("NCH", "OIH", "NCH"))
    return y + b[None, :, None]


def wavenet_reference(x_ncw, p, *, dilations, cfg):
    N, C, W = x_ncw.shape
    R = cfg["n_chans_res"]
    # ShiftedCausal1d: F.pad(x, (1, -1)) then causal pad (k-1)*d = 1
    xs = jnp.concatenate([jnp.zeros((N, C, 1), x_ncw.dtype), x_ncw[:, :, :-1]],
                         axis=2)
    h = jax.nn.relu(_torch_conv1d(xs, p["w_shift"], p["b_shift"], 1, 1))
    skips = 0.0
    for i, d in enumerate(dilations):
        pre = _torch_conv1d(h, p["w_conv"][i], p["b_conv"][i], d, d)
        gated = pre[:, :R] * jax.nn.sigmoid(pre[:, R:])
        res = (jnp.einsum("oi,niw->now", p["w_res"][i][:, :, 0], gated)
               + p["b_res"][i][None, :, None])
        skip = (jnp.einsum("oi,niw->now", p["w_skip"][i][:, :, 0], gated)
                + p["b_skip"][i][None, :, None])
        h = res + h
        skips = skips + skip
    s = jax.nn.relu(skips)
    e = jax.nn.relu(jnp.einsum("oi,niw->now", p["w_a"][:, :, 0], s)
                    + p["b_a"][None, :, None])
    logits = (jnp.einsum("oi,niw->now", p["w_b"][:, :, 0], e)
              + p["b_b"][None, :, None])
    return logits.reshape(N, cfg["n_classes"], cfg["n_audio_chans"], W)


# ----------------------------------------------------------------------------
# Deterministic parameter construction + kernel-layout (channel-major) weights.
# ----------------------------------------------------------------------------
def make_params(key, cfg, dilations):
    Cin = cfg["n_audio_chans"]            # embed_inputs=False -> n_input_chans
    Cc, R, S, E = (cfg["n_chans"], cfg["n_chans_res"],
                   cfg["n_chans_skip"], cfg["n_chans_end"])
    n_logits = cfg["n_classes"] * cfg["n_audio_chans"]
    L = len(dilations)

    def nrm(key, shape, scale=0.2):
        return scale * jax.random.normal(key, shape, jnp.float32)

    keys = iter(jax.random.split(key, 64))
    p = {
        "w_shift": nrm(next(keys), (Cc, Cin, 2)),
        "b_shift": nrm(next(keys), (Cc,), 0.05),
        "w_conv": [nrm(next(keys), (2 * R, Cc, 2)) for _ in range(L)],
        "b_conv": [nrm(next(keys), (2 * R,), 0.05) for _ in range(L)],
        "w_res": [nrm(next(keys), (Cc, R, 1)) for _ in range(L)],
        "b_res": [nrm(next(keys), (Cc,), 0.05) for _ in range(L)],
        "w_skip": [nrm(next(keys), (S, R, 1)) for _ in range(L)],
        "b_skip": [nrm(next(keys), (S,), 0.05) for _ in range(L)],
        "w_a": nrm(next(keys), (E, S, 1)),
        "b_a": nrm(next(keys), (E,), 0.05),
        "w_b": nrm(next(keys), (n_logits, E, 1)),
        "b_b": nrm(next(keys), (n_logits,), 0.05),
    }

    # Kernel layout (channel-major, activations are (C, W)):
    #  - both conv taps stacked on the contraction (column) axis,
    #  - res/skip 1x1 weights stacked on the output (row) axis,
    #  - biases as (Cout, 1) columns (broadcast over lanes/time).
    kparams = {
        "ws": jnp.concatenate([p["w_shift"][:, :, 0],
                               p["w_shift"][:, :, 1]], axis=1),  # (Cc, 2Cin)
        "bs": p["b_shift"][:, None],                             # (Cc, 1)
        "wc": jnp.stack([jnp.concatenate([w[:, :, 0], w[:, :, 1]], axis=1)
                         for w in p["w_conv"]]),                 # (L, 2R, 2Cc)
        "bc": jnp.stack(p["b_conv"])[:, :, None],                # (L, 2R, 1)
        "wrk": jnp.stack([jnp.concatenate([wr[:, :, 0], wk[:, :, 0]], axis=0)
                          for wr, wk in zip(p["w_res"], p["w_skip"])]),
                                                                 # (L, Cc+S, R)
        "brk": jnp.stack([jnp.concatenate([br, bk])
                          for br, bk in zip(p["b_res"],
                                            p["b_skip"])])[:, :, None],
                                                                 # (L, Cc+S, 1)
        "wa": p["w_a"][:, :, 0],                                 # (E, S)
        "ba": p["b_a"][:, None],                                 # (E, 1)
        "wb": p["w_b"][:, :, 0],                                 # (n_logits, E)
        "bb": p["b_b"][:, None],                                 # (n_logits, 1)
    }
    return p, kparams


if __name__ == "__main__":
    cfg = dict(n_audio_chans=1, n_classes=16, n_chans=32, n_chans_res=32,
               n_chans_skip=32, n_chans_end=32, kernel_size=2,
               n_layers=3, dilation_stacks=1)
    dilations = [2 ** i for _ in range(cfg["dilation_stacks"])
                 for i in range(cfg["n_layers"])]            # [1, 2, 4]

    N, C, W = 4, cfg["n_audio_chans"], 16

    key = jax.random.PRNGKey(0)
    kx, kp = jax.random.split(key)
    x = jax.random.normal(kx, (N, C, W), jnp.float32)        # mu-law normalised
    torch_params, kparams = make_params(kp, cfg, dilations)

    # f32 matmuls for a tight check; use matmul_dtype=jnp.bfloat16 on v6e/v7x.
    out = wavenet_pallas(x, kparams, dilations=dilations, cfg=cfg,
                         matmul_dtype=jnp.float32)
    out = jax.block_until_ready(out)

    ref = jax.block_until_ready(
        wavenet_reference(x, torch_params, dilations=dilations, cfg=cfg))

    assert out.shape == (N, cfg["n_classes"], cfg["n_audio_chans"], W), out.shape
    np.testing.assert_allclose(np.asarray(out), np.asarray(ref),
                               rtol=1e-4, atol=1e-4)
    print("KERNEL_OK")
</pallas_src>

<mosaic_0001>
module attributes {stable_mosaic.version = 11 : i64} {
  func.func @wavenet_kernel(%arg0: i32, %arg1: memref<1x1x16xf32, #tpu.memory_space<vmem>>, %arg2: memref<32x2xf32, #tpu.memory_space<vmem>>, %arg3: memref<32x1xf32, #tpu.memory_space<vmem>>, %arg4: memref<3x64x64xf32, #tpu.memory_space<vmem>>, %arg5: memref<3x64x1xf32, #tpu.memory_space<vmem>>, %arg6: memref<3x64x32xf32, #tpu.memory_space<vmem>>, %arg7: memref<3x64x1xf32, #tpu.memory_space<vmem>>, %arg8: memref<32x32xf32, #tpu.memory_space<vmem>>, %arg9: memref<32x1xf32, #tpu.memory_space<vmem>>, %arg10: memref<16x32xf32, #tpu.memory_space<vmem>>, %arg11: memref<16x1xf32, #tpu.memory_space<vmem>>, %arg12: memref<1x16x16xf32, #tpu.memory_space<vmem>>, %arg13: memref<32x20xf32, #tpu.memory_space<vmem>>) attributes {dimension_semantics = [#tpu.dimension_semantics<parallel>], iteration_bounds = array<i64: 4>, scalar_prefetch = 0 : i64, scratch_operands = 1 : i64, tpu.core_type = #tpu.core_type<tc>, window_params = [{transform_indices = @transform_0, window_bounds = array<i64: 1, 1, 16>}, {pipeline_mode = #tpu.pipeline_mode<synchronous>, transform_indices = @transform_1, window_bounds = array<i64: 32, 2>}, {pipeline_mode = #tpu.pipeline_mode<synchronous>, transform_indices = @transform_2, window_bounds = array<i64: 32, 1>}, {pipeline_mode = #tpu.pipeline_mode<synchronous>, transform_indices = @transform_3, window_bounds = array<i64: 3, 64, 64>}, {pipeline_mode = #tpu.pipeline_mode<synchronous>, transform_indices = @transform_4, window_bounds = array<i64: 3, 64, 1>}, {pipeline_mode = #tpu.pipeline_mode<synchronous>, transform_indices = @transform_5, window_bounds = array<i64: 3, 64, 32>}, {pipeline_mode = #tpu.pipeline_mode<synchronous>, transform_indices = @transform_6, window_bounds = array<i64: 3, 64, 1>}, {pipeline_mode = #tpu.pipeline_mode<synchronous>, transform_indices = @transform_7, window_bounds = array<i64: 32, 32>}, {pipeline_mode = #tpu.pipeline_mode<synchronous>, transform_indices = @transform_8, window_bounds = array<i64: 32, 1>}, {pipeline_mode = #tpu.pipeline_mode<synchronous>, transform_indices = @transform_9, window_bounds = array<i64: 16, 32>}, {pipeline_mode = #tpu.pipeline_mode<synchronous>, transform_indices = @transform_10, window_bounds = array<i64: 16, 1>}, {transform_indices = @transform_11, window_bounds = array<i64: 1, 16, 16>}]} {
    %c0 = arith.constant 0 : index
    %c0_0 = arith.constant 0 : index
    %c0_1 = arith.constant 0 : index
    %0 = vector.load %arg1[%c0, %c0_0, %c0_1] : memref<1x1x16xf32, #tpu.memory_space<vmem>>, vector<1x1x16xf32>
    %1 = vector.shape_cast %0 : vector<1x1x16xf32> to vector<1x16xf32>
    %cst = arith.constant 0.000000e+00 : f32
    %2 = vector.broadcast %cst : f32 to vector<1x2xf32>
    %3 = vector.extract_strided_slice %1 {offsets = [0, 0], sizes = [1, 14], strides = [1, 1]} : vector<1x16xf32> to vector<1x14xf32>
    %4 = tpu.concatenate %2, %3 in 1 : vector<1x2xf32>, vector<1x14xf32> -> vector<1x16xf32>
    %cst_2 = arith.constant 0.000000e+00 : f32
    %5 = vector.broadcast %cst_2 : f32 to vector<1x1xf32>
    %6 = vector.extract_strided_slice %1 {offsets = [0, 0], sizes = [1, 15], strides = [1, 1]} : vector<1x16xf32> to vector<1x15xf32>
    %7 = tpu.concatenate %5, %6 in 1 : vector<1x1xf32>, vector<1x15xf32> -> vector<1x16xf32>
    %c0_3 = arith.constant 0 : index
    %c0_4 = arith.constant 0 : index
    %8 = vector.load %arg2[%c0_3, %c0_4] : memref<32x2xf32, #tpu.memory_space<vmem>>, vector<32x2xf32>
    %9 = vector.extract_strided_slice %8 {offsets = [0, 0], sizes = [32, 1], strides = [1, 1]} : vector<32x2xf32> to vector<32x1xf32>
    %10 = vector.broadcast %4 : vector<1x16xf32> to vector<32x16xf32>
    %11 = vector.broadcast %9 : vector<32x1xf32> to vector<32x16xf32>
    %12 = arith.mulf %10, %11 : vector<32x16xf32>
    %13 = vector.extract_strided_slice %8 {offsets = [0, 1], sizes = [32, 1], strides = [1, 1]} : vector<32x2xf32> to vector<32x1xf32>
    %14 = vector.broadcast %7 : vector<1x16xf32> to vector<32x16xf32>
    %15 = vector.broadcast %13 : vector<32x1xf32> to vector<32x16xf32>
    %16 = arith.mulf %14, %15 : vector<32x16xf32>
    %17 = arith.addf %12, %16 : vector<32x16xf32>
    %c0_5 = arith.constant 0 : index
    %c0_6 = arith.constant 0 : index
    %18 = vector.load %arg3[%c0_5, %c0_6] : memref<32x1xf32, #tpu.memory_space<vmem>>, vector<32x1xf32>
    %19 = vector.broadcast %18 : vector<32x1xf32> to vector<32x16xf32>
    %20 = arith.addf %17, %19 : vector<32x16xf32>
    %cst_7 = arith.constant 0.000000e+00 : f32
    %21 = vector.broadcast %cst_7 : f32 to vector<32x16xf32>
    %22 = arith.maximumf %20, %21 : vector<32x16xf32>
    %cst_8 = arith.constant 0.000000e+00 : f32
    %23 = vector.broadcast %cst_8 : f32 to vector<32x4xf32>
    %c0_9 = arith.constant 0 : index
    %c0_10 = arith.constant 0 : index
    %24 = vector.load %arg13[%c0_9, %c0_10] : memref<32x20xf32, #tpu.memory_space<vmem>>, vector<32x4xf32>
    tpu.vector_store %arg13[%c0_9, %c0_10], %23 {strides = array<i32>} : memref<32x20xf32, #tpu.memory_space<vmem>>, vector<32x4xf32>,
    %cst_11 = arith.constant 0.000000e+00 : f32
    %25 = vector.broadcast %cst_11 : f32 to vector<32x16xf32>
    %c0_12 = arith.constant 0 : index
    %c4 = arith.constant 4 : index
    %26 = vector.load %arg13[%c0_12, %c4] : memref<32x20xf32, #tpu.memory_space<vmem>>, vector<32x16xf32>
    tpu.vector_store %arg13[%c0_12, %c4], %22 {strides = array<i32>} : memref<32x20xf32, #tpu.memory_space<vmem>>, vector<32x16xf32>,
    %c0_13 = arith.constant 0 : index
    %c3 = arith.constant 3 : index
    %27 = vector.load %arg13[%c0_13, %c3] : memref<32x20xf32, #tpu.memory_space<vmem>>, vector<32x16xf32>
    %28 = tpu.concatenate %27, %22 in 0 : vector<32x16xf32>, vector<32x16xf32> -> vector<64x16xf32>
    %c0_14 = arith.constant 0 : index
    %c0_15 = arith.constant 0 : index
    %c0_16 = arith.constant 0 : index
    %29 = vector.load %arg4[%c0_14, %c0_15, %c0_16] : memref<3x64x64xf32, #tpu.memory_space<vmem>>, vector<1x64x64xf32>
    %30 = vector.shape_cast %29 : vector<1x64x64xf32> to vector<64x64xf32>
    %cst_17 = arith.constant dense<0.000000e+00> : vector<64x16xf32>
    %31 = tpu.matmul %30, %28, %cst_17 {dimension_numbers = #tpu.dot_dimension_numbers<[1], [0], [0], [1], [0, 0, 1, 1], [], []>} : vector<64x64xf32>, vector<64x16xf32>, vector<64x16xf32> -> vector<64x16xf32>
    %c0_18 = arith.constant 0 : index
    %c0_19 = arith.constant 0 : index
    %c0_20 = arith.constant 0 : index
    %32 = vector.load %arg5[%c0_18, %c0_19, %c0_20] : memref<3x64x1xf32, #tpu.memory_space<vmem>>, vector<1x64x1xf32>
    %33 = vector.shape_cast %32 : vector<1x64x1xf32> to vector<64x1xf32>
    %34 = vector.broadcast %33 : vector<64x1xf32> to vector<64x16xf32>
    %35 = arith.addf %31, %34 : vector<64x16xf32>
    %36 = vector.extract_strided_slice %35 {offsets = [0, 0], sizes = [32, 16], strides = [1, 1]} : vector<64x16xf32> to vector<32x16xf32>
    %37 = vector.extract_strided_slice %35 {offsets = [32, 0], sizes = [32, 16], strides = [1, 1]} : vector<64x16xf32> to vector<32x16xf32>
    %38 = arith.negf %37 : vector<32x16xf32>
    %39 = math.exp %38 : vector<32x16xf32>
    %cst_21 = arith.constant 1.000000e+00 : f32
    %40 = vector.broadcast %cst_21 : f32 to vector<32x16xf32>
    %41 = arith.addf %40, %39 : vector<32x16xf32>
    %42 = arith.divf %40, %41 : vector<32x16xf32>
    %43 = arith.mulf %36, %42 : vector<32x16xf32>
    %c0_22 = arith.constant 0 : index
    %c0_23 = arith.constant 0 : index
    %c0_24 = arith.constant 0 : index
    %44 = vector.load %arg6[%c0_22, %c0_23, %c0_24] : memref<3x64x32xf32, #tpu.memory_space<vmem>>, vector<1x64x32xf32>
    %45 = vector.shape_cast %44 : vector<1x64x32xf32> to vector<64x32xf32>
    %cst_25 = arith.constant dense<0.000000e+00> : vector<64x16xf32>
    %46 = tpu.matmul %45, %43, %cst_25 {dimension_numbers = #tpu.dot_dimension_numbers<[1], [0], [0], [1], [0, 0, 1, 1], [], []>} : vector<64x32xf32>, vector<32x16xf32>, vector<64x16xf32> -> vector<64x16xf32>
    %c0_26 = arith.constant 0 : index
    %c0_27 = arith.constant 0 : index
    %c0_28 = arith.constant 0 : index
    %47 = vector.load %arg7[%c0_26, %c0_27, %c0_28] : memref<3x64x1xf32, #tpu.memory_space<vmem>>, vector<1x64x1xf32>
    %48 = vector.shape_cast %47 : vector<1x64x1xf32> to vector<64x1xf32>
    %49 = vector.broadcast %48 : vector<64x1xf32> to vector<64x16xf32>
    %50 = arith.addf %46, %49 : vector<64x16xf32>
    %51 = vector.extract_strided_slice %50 {offsets = [0, 0], sizes = [32, 16], strides = [1, 1]} : vector<64x16xf32> to vector<32x16xf32>
    %52 = arith.addf %51, %22 : vector<32x16xf32>
    %53 = vector.extract_strided_slice %50 {offsets = [32, 0], sizes = [32, 16], strides = [1, 1]} : vector<64x16xf32> to vector<32x16xf32>
    %54 = arith.addf %25, %53 : vector<32x16xf32>
    %c0_29 = arith.constant 0 : index
    %c4_30 = arith.constant 4 : index
    %55 = vector.load %arg13[%c0_29, %c4_30] : memref<32x20xf32, #tpu.memory_space<vmem>>, vector<32x16xf32>
    tpu.vector_store %arg13[%c0_29, %c4_30], %52 {strides = array<i32>} : memref<32x20xf32, #tpu.memory_space<vmem>>, vector<32x16xf32>,
    %c0_31 = arith.constant 0 : index
    %c2 = arith.constant 2 : index
    %56 = vector.load %arg13[%c0_31, %c2] : memref<32x20xf32, #tpu.memory_space<vmem>>, vector<32x16xf32>
    %57 = tpu.concatenate %56, %52 in 0 : vector<32x16xf32>, vector<32x16xf32> -> vector<64x16xf32>
    %c1 = arith.constant 1 : index
    %c0_32 = arith.constant 0 : index
    %c0_33 = arith.constant 0 : index
    %58 = vector.load %arg4[%c1, %c0_32, %c0_33] : memref<3x64x64xf32, #tpu.memory_space<vmem>>, vector<1x64x64xf32>
    %59 = vector.shape_cast %58 : vector<1x64x64xf32> to vector<64x64xf32>
    %cst_34 = arith.constant dense<0.000000e+00> : vector<64x16xf32>
    %60 = tpu.matmul %59, %57, %cst_34 {dimension_numbers = #tpu.dot_dimension_numbers<[1], [0], [0], [1], [0, 0, 1, 1], [], []>} : vector<64x64xf32>, vector<64x16xf32>, vector<64x16xf32> -> vector<64x16xf32>
    %c1_35 = arith.constant 1 : index
    %c0_36 = arith.constant 0 : index
    %c0_37 = arith.constant 0 : index
    %61 = vector.load %arg5[%c1_35, %c0_36, %c0_37] : memref<3x64x1xf32, #tpu.memory_space<vmem>>, vector<1x64x1xf32>
    %62 = vector.shape_cast %61 : vector<1x64x1xf32> to vector<64x1xf32>
    %63 = vector.broadcast %62 : vector<64x1xf32> to vector<64x16xf32>
    %64 = arith.addf %60, %63 : vector<64x16xf32>
    %65 = vector.extract_strided_slice %64 {offsets = [0, 0], sizes = [32, 16], strides = [1, 1]} : vector<64x16xf32> to vector<32x16xf32>
    %66 = vector.extract_strided_slice %64 {offsets = [32, 0], sizes = [32, 16], strides = [1, 1]} : vector<64x16xf32> to vector<32x16xf32>
    %67 = arith.negf %66 : vector<32x16xf32>
    %68 = math.exp %67 : vector<32x16xf32>
    %cst_38 = arith.constant 1.000000e+00 : f32
    %69 = vector.broadcast %cst_38 : f32 to vector<32x16xf32>
    %70 = arith.addf %69, %68 : vector<32x16xf32>
    %71 = arith.divf %69, %70 : vector<32x16xf32>
    %72 = arith.mulf %65, %71 : vector<32x16xf32>
    %c1_39 = arith.constant 1 : index
    %c0_40 = arith.constant 0 : index
    %c0_41 = arith.constant 0 : index
    %73 = vector.load %arg6[%c1_39, %c0_40, %c0_41] : memref<3x64x32xf32, #tpu.memory_space<vmem>>, vector<1x64x32xf32>
    %74 = vector.shape_cast %73 : vector<1x64x32xf32> to vector<64x32xf32>
    %cst_42 = arith.constant dense<0.000000e+00> : vector<64x16xf32>
    %75 = tpu.matmul %74, %72, %cst_42 {dimension_numbers = #tpu.dot_dimension_numbers<[1], [0], [0], [1], [0, 0, 1, 1], [], []>} : vector<64x32xf32>, vector<32x16xf32>, vector<64x16xf32> -> vector<64x16xf32>
    %c1_43 = arith.constant 1 : index
    %c0_44 = arith.constant 0 : index
    %c0_45 = arith.constant 0 : index
    %76 = vector.load %arg7[%c1_43, %c0_44, %c0_45] : memref<3x64x1xf32, #tpu.memory_space<vmem>>, vector<1x64x1xf32>
    %77 = vector.shape_cast %76 : vector<1x64x1xf32> to vector<64x1xf32>
    %78 = vector.broadcast %77 : vector<64x1xf32> to vector<64x16xf32>
    %79 = arith.addf %75, %78 : vector<64x16xf32>
    %80 = vector.extract_strided_slice %79 {offsets = [0, 0], sizes = [32, 16], strides = [1, 1]} : vector<64x16xf32> to vector<32x16xf32>
    %81 = arith.addf %80, %52 : vector<32x16xf32>
    %82 = vector.extract_strided_slice %79 {offsets = [32, 0], sizes = [32, 16], strides = [1, 1]} : vector<64x16xf32> to vector<32x16xf32>
    %83 = arith.addf %54, %82 : vector<32x16xf32>
    %c0_46 = arith.constant 0 : index
    %c4_47 = arith.constant 4 : index
    %84 = vector.load %arg13[%c0_46, %c4_47] : memref<32x20xf32, #tpu.memory_space<vmem>>, vector<32x16xf32>
    tpu.vector_store %arg13[%c0_46, %c4_47], %81 {strides = array<i32>} : memref<32x20xf32, #tpu.memory_space<vmem>>, vector<32x16xf32>,
    %c0_48 = arith.constant 0 : index
    %c0_49 = arith.constant 0 : index
    %85 = vector.load %arg13[%c0_48, %c0_49] : memref<32x20xf32, #tpu.memory_space<vmem>>, vector<32x16xf32>
    %86 = tpu.concatenate %85, %81 in 0 : vector<32x16xf32>, vector<32x16xf32> -> vector<64x16xf32>
    %c2_50 = arith.constant 2 : index
    %c0_51 = arith.constant 0 : index
    %c0_52 = arith.constant 0 : index
    %87 = vector.load %arg4[%c2_50, %c0_51, %c0_52] : memref<3x64x64xf32, #tpu.memory_space<vmem>>, vector<1x64x64xf32>
    %88 = vector.shape_cast %87 : vector<1x64x64xf32> to vector<64x64xf32>
    %cst_53 = arith.constant dense<0.000000e+00> : vector<64x16xf32>
    %89 = tpu.matmul %88, %86, %cst_53 {dimension_numbers = #tpu.dot_dimension_numbers<[1], [0], [0], [1], [0, 0, 1, 1], [], []>} : vector<64x64xf32>, vector<64x16xf32>, vector<64x16xf32> -> vector<64x16xf32>
    %c2_54 = arith.constant 2 : index
    %c0_55 = arith.constant 0 : index
    %c0_56 = arith.constant 0 : index
    %90 = vector.load %arg5[%c2_54, %c0_55, %c0_56] : memref<3x64x1xf32, #tpu.memory_space<vmem>>, vector<1x64x1xf32>
    %91 = vector.shape_cast %90 : vector<1x64x1xf32> to vector<64x1xf32>
    %92 = vector.broadcast %91 : vector<64x1xf32> to vector<64x16xf32>
    %93 = arith.addf %89, %92 : vector<64x16xf32>
    %94 = vector.extract_strided_slice %93 {offsets = [0, 0], sizes = [32, 16], strides = [1, 1]} : vector<64x16xf32> to vector<32x16xf32>
    %95 = vector.extract_strided_slice %93 {offsets = [32, 0], sizes = [32, 16], strides = [1, 1]} : vector<64x16xf32> to vector<32x16xf32>
    %96 = arith.negf %95 : vector<32x16xf32>
    %97 = math.exp %96 : vector<32x16xf32>
    %cst_57 = arith.constant 1.000000e+00 : f32
    %98 = vector.broadcast %cst_57 : f32 to vector<32x16xf32>
    %99 = arith.addf %98, %97 : vector<32x16xf32>
    %100 = arith.divf %98, %99 : vector<32x16xf32>
    %101 = arith.mulf %94, %100 : vector<32x16xf32>
    %c2_58 = arith.constant 2 : index
    %c0_59 = arith.constant 0 : index
    %c0_60 = arith.constant 0 : index
    %102 = vector.load %arg6[%c2_58, %c0_59, %c0_60] : memref<3x64x32xf32, #tpu.memory_space<vmem>>, vector<1x64x32xf32>
    %103 = vector.shape_cast %102 : vector<1x64x32xf32> to vector<64x32xf32>
    %cst_61 = arith.constant dense<0.000000e+00> : vector<64x16xf32>
    %104 = tpu.matmul %103, %101, %cst_61 {dimension_numbers = #tpu.dot_dimension_numbers<[1], [0], [0], [1], [0, 0, 1, 1], [], []>} : vector<64x32xf32>, vector<32x16xf32>, vector<64x16xf32> -> vector<64x16xf32>
    %c2_62 = arith.constant 2 : index
    %c0_63 = arith.constant 0 : index
    %c0_64 = arith.constant 0 : index
    %105 = vector.load %arg7[%c2_62, %c0_63, %c0_64] : memref<3x64x1xf32, #tpu.memory_space<vmem>>, vector<1x64x1xf32>
    %106 = vector.shape_cast %105 : vector<1x64x1xf32> to vector<64x1xf32>
    %107 = vector.broadcast %106 : vector<64x1xf32> to vector<64x16xf32>
    %108 = arith.addf %104, %107 : vector<64x16xf32>
    %109 = vector.extract_strided_slice %108 {offsets = [32, 0], sizes = [32, 16], strides = [1, 1]} : vector<64x16xf32> to vector<32x16xf32>
    %110 = arith.addf %83, %109 : vector<32x16xf32>
    %cst_65 = arith.constant 0.000000e+00 : f32
    %111 = vector.broadcast %cst_65 : f32 to vector<32x16xf32>
    %112 = arith.maximumf %110, %111 : vector<32x16xf32>
    %c0_66 = arith.constant 0 : index
    %c0_67 = arith.constant 0 : index
    %113 = vector.load %arg8[%c0_66, %c0_67] : memref<32x32xf32, #tpu.memory_space<vmem>>, vector<32x32xf32>
    %cst_68 = arith.constant dense<0.000000e+00> : vector<32x16xf32>
    %114 = tpu.matmul %113, %112, %cst_68 {dimension_numbers = #tpu.dot_dimension_numbers<[1], [0], [0], [1], [0, 0, 1, 1], [], []>} : vector<32x32xf32>, vector<32x16xf32>, vector<32x16xf32> -> vector<32x16xf32>
    %c0_69 = arith.constant 0 : index
    %c0_70 = arith.constant 0 : index
    %115 = vector.load %arg9[%c0_69, %c0_70] : memref<32x1xf32, #tpu.memory_space<vmem>>, vector<32x1xf32>
    %116 = vector.broadcast %115 : vector<32x1xf32> to vector<32x16xf32>
    %117 = arith.addf %114, %116 : vector<32x16xf32>
    %cst_71 = arith.constant 0.000000e+00 : f32
    %118 = vector.broadcast %cst_71 : f32 to vector<32x16xf32>
    %119 = arith.maximumf %117, %118 : vector<32x16xf32>
    %c0_72 = arith.constant 0 : index
    %c0_73 = arith.constant 0 : index
    %120 = vector.load %arg10[%c0_72, %c0_73] : memref<16x32xf32, #tpu.memory_space<vmem>>, vector<16x32xf32>
    %cst_74 = arith.constant dense<0.000000e+00> : vector<16x16xf32>
    %121 = tpu.matmul %120, %119, %cst_74 {dimension_numbers = #tpu.dot_dimension_numbers<[1], [0], [0], [1], [0, 0, 1, 1], [], []>} : vector<16x32xf32>, vector<32x16xf32>, vector<16x16xf32> -> vector<16x16xf32>
    %c0_75 = arith.constant 0 : index
    %c0_76 = arith.constant 0 : index
    %122 = vector.load %arg11[%c0_75, %c0_76] : memref<16x1xf32, #tpu.memory_space<vmem>>, vector<16x1xf32>
    %123 = vector.broadcast %122 : vector<16x1xf32> to vector<16x16xf32>
    %124 = arith.addf %121, %123 : vector<16x16xf32>
    %c0_77 = arith.constant 0 : index
    %c0_78 = arith.constant 0 : index
    %c0_79 = arith.constant 0 : index
    %125 = vector.load %arg12[%c0_77, %c0_78, %c0_79] : memref<1x16x16xf32, #tpu.memory_space<vmem>>, vector<1x16x16xf32>
    %126 = vector.shape_cast %125 : vector<1x16x16xf32> to vector<16x16xf32>
    %127 = vector.shape_cast %124 : vector<16x16xf32> to vector<1x16x16xf32>
    tpu.vector_store %arg12[%c0_77, %c0_78, %c0_79], %127 {strides = array<i32>} : memref<1x16x16xf32, #tpu.memory_space<vmem>>, vector<1x16x16xf32>,
    return
  }
  func.func @transform_0(%arg0: i32) -> (i32, i32, i32) {
    %c0_i32 = arith.constant 0 : i32
    %c0_i32_0 = arith.constant 0 : i32
    %c0_i32_1 = arith.constant 0 : i32
    return %arg0, %c0_i32, %c0_i32_0 : i32, i32, i32
  }
  func.func @transform_1(%arg0: i32) -> (i32, i32) {
    %c0_i32 = arith.constant 0 : i32
    %c0_i32_0 = arith.constant 0 : i32
    %c0_i32_1 = arith.constant 0 : i32
    return %c0_i32, %c0_i32_0 : i32, i32
  }
  func.func @transform_2(%arg0: i32) -> (i32, i32) {
    %c0_i32 = arith.constant 0 : i32
    %c0_i32_0 = arith.constant 0 : i32
    %c0_i32_1 = arith.constant 0 : i32
    return %c0_i32, %c0_i32_0 : i32, i32
  }
  func.func @transform_3(%arg0: i32) -> (i32, i32, i32) {
    %c0_i32 = arith.constant 0 : i32
    %c0_i32_0 = arith.constant 0 : i32
    %c0_i32_1 = arith.constant 0 : i32
    %c0_i32_2 = arith.constant 0 : i32
    return %c0_i32, %c0_i32_0, %c0_i32_1 : i32, i32, i32
  }
  func.func @transform_4(%arg0: i32) -> (i32, i32, i32) {
    %c0_i32 = arith.constant 0 : i32
    %c0_i32_0 = arith.constant 0 : i32
    %c0_i32_1 = arith.constant 0 : i32
    %c0_i32_2 = arith.constant 0 : i32
    return %c0_i32, %c0_i32_0, %c0_i32_1 : i32, i32, i32
  }
  func.func @transform_5(%arg0: i32) -> (i32, i32, i32) {
    %c0_i32 = arith.constant 0 : i32
    %c0_i32_0 = arith.constant 0 : i32
    %c0_i32_1 = arith.constant 0 : i32
    %c0_i32_2 = arith.constant 0 : i32
    return %c0_i32, %c0_i32_0, %c0_i32_1 : i32, i32, i32
  }
  func.func @transform_6(%arg0: i32) -> (i32, i32, i32) {
    %c0_i32 = arith.constant 0 : i32
    %c0_i32_0 = arith.constant 0 : i32
    %c0_i32_1 = arith.constant 0 : i32
    %c0_i32_2 = arith.constant 0 : i32
    return %c0_i32, %c0_i32_0, %c0_i32_1 : i32, i32, i32
  }
  func.func @transform_7(%arg0: i32) -> (i32, i32) {
    %c0_i32 = arith.constant 0 : i32
    %c0_i32_0 = arith.constant 0 : i32
    %c0_i32_1 = arith.constant 0 : i32
    return %c0_i32, %c0_i32_0 : i32, i32
  }
  func.func @transform_8(%arg0: i32) -> (i32, i32) {
    %c0_i32 = arith.constant 0 : i32
    %c0_i32_0 = arith.constant 0 : i32
    %c0_i32_1 = arith.constant 0 : i32
    return %c0_i32, %c0_i32_0 : i32, i32
  }
  func.func @transform_9(%arg0: i32) -> (i32, i32) {
    %c0_i32 = arith.constant 0 : i32
    %c0_i32_0 = arith.constant 0 : i32
    %c0_i32_1 = arith.constant 0 : i32
    return %c0_i32, %c0_i32_0 : i32, i32
  }
  func.func @transform_10(%arg0: i32) -> (i32, i32) {
    %c0_i32 = arith.constant 0 : i32
    %c0_i32_0 = arith.constant 0 : i32
    %c0_i32_1 = arith.constant 0 : i32
    return %c0_i32, %c0_i32_0 : i32, i32
  }
  func.func @transform_11(%arg0: i32) -> (i32, i32, i32) {
    %c0_i32 = arith.constant 0 : i32
    %c0_i32_0 = arith.constant 0 : i32
    %c0_i32_1 = arith.constant 0 : i32
    return %arg0, %c0_i32, %c0_i32_0 : i32, i32, i32
  }
}

</mosaic_0001>

<llo_original>
// kernel: tpu_custom_call.1
$region0: #{tpu_custom_call.1}
  #allocation0 [shape = 'u32[]', space=smem, size = 0x4, offset = 0x4, fixed_abs, tag = 'smem constant byte address 0x4 - core index']
  #allocation1 [shape = 'u32[144,128]{1,0:T(1,128)}', space=vmem, size = 0x12000, scoped, tag = 'internal scratch']
  #allocation2 [shape = 'f32[32,20]{1,0:T(8,128)}', space=vmem, size = 0x4000, scoped, tag = 'scratch operand']
  %s0 = inlined_call_operand.vmem [shape: f32[4,1,16], index: 0, kind: input, shape index: {}]
  %s1 = inlined_call_operand.vmem [shape: f32[32,2], index: 1, kind: input, shape index: {}]
  %s2 = inlined_call_operand.vmem [shape: f32[32,1], index: 2, kind: input, shape index: {}]
  %s3 = inlined_call_operand.vmem [shape: f32[3,64,64], index: 3, kind: input, shape index: {}]
  %s4 = inlined_call_operand.vmem [shape: f32[3,64,1], index: 4, kind: input, shape index: {}]
  %s5 = inlined_call_operand.vmem [shape: f32[3,64,32], index: 5, kind: input, shape index: {}]
  %s6 = inlined_call_operand.vmem [shape: f32[3,64,1], index: 6, kind: input, shape index: {}]
  %s7 = inlined_call_operand.vmem [shape: f32[32,32], index: 7, kind: input, shape index: {}]
  %s8 = inlined_call_operand.vmem [shape: f32[32,1], index: 8, kind: input, shape index: {}]
  %s9 = inlined_call_operand.vmem [shape: f32[16,32], index: 9, kind: input, shape index: {}]
  %s10 = inlined_call_operand.vmem [shape: f32[16,1], index: 10, kind: input, shape index: {}]
  %s11 = inlined_call_operand.hbm [shape: f32[4,16,16], index: 11, kind: output, shape index: {}]
  %s12 = sld [smem:[#allocation0]]
  $region77: #{tpu_custom_call.1} parent=0
    _
  %s14 = ssub.s32 1, %s12
  %s15 = scalar_select 0, %s14, %s12
  $region1: #{tpu_custom_call.1} parent=0
    #allocation3 [shape = 'u8[16384]{0}', space=vmem, size = 0x4000, scoped, tag = 'output window, operand 0']
    #allocation4 [shape = 's32[2]{0}', space=sflag, size = 0x8, scoped, tag = 'scoped memory for tpu_custom_call.1']
    %16 = vsyncpa [#allocation4], 0
    %s17 = scalar_lea.sflag [#allocation4], 1
    %18 = vsyncpa %s17, 0
    loop: start=0, step=1, limit=6
    $region2: #{tpu_custom_call.1} parent=1 // loop_pre_header
      _
    $region3: #{tpu_custom_call.1} parent=1 // loop_header
      %s20 = sphi 0, %s24
      %p21 = scmp.ge.s32.totalorder %s20, 6
      %s30 = sphi 0, %s32
      %s33 = sphi 0, %s30
      %s34 = sphi 0, %s33
      %s50 = sphi 0, %s34
      %s54 = sphi 0, %s54
      %s56 = sphi 0, %s54
      %s57 = sphi 0, %s56
      %s71 = sphi 0, %s57
      %s75 = sphi 0, %s75
      %s77 = sphi 0, %s75
      %s78 = sphi 0, %s77
      %s92 = sphi 0, %s78
      %s96 = sphi 0, %s96
      %s98 = sphi 0, %s96
      %s99 = sphi 0, %s98
      %s113 = sphi 0, %s99
      %s117 = sphi 0, %s117
      %s119 = sphi 0, %s117
      %s120 = sphi 0, %s119
      %s134 = sphi 0, %s120
      %s138 = sphi 0, %s138
      %s140 = sphi 0, %s138
      %s141 = sphi 0, %s140
      %s155 = sphi 0, %s141
      %s159 = sphi 0, %s159
      %s161 = sphi 0, %s159
      %s162 = sphi 0, %s161
      %s176 = sphi 0, %s162
      %s180 = sphi 0, %s180
      %s182 = sphi 0, %s180
      %s183 = sphi 0, %s182
      %s197 = sphi 0, %s183
      %s201 = sphi 0, %s201
      %s203 = sphi 0, %s201
      %s204 = sphi 0, %s203
      %s218 = sphi 0, %s204
      %s222 = sphi 0, %s222
      %s224 = sphi 0, %s222
      %s225 = sphi 0, %s224
      %s239 = sphi 0, %s225
      %s243 = sphi 0, %s243
      %s245 = sphi 0, %s243
      %s246 = sphi 0, %s245
      %s260 = sphi 0, %s246
      %s266 = sphi 0, %s268
      %s269 = sphi 0, %s266
      %s270 = sphi 0, %s269
      %s286 = sphi 0, %s270
    $region4: #{tpu_custom_call.1} parent=1 // loop_header_branch
      %23 = sbr.rel (%p21) target = $region8
    $region5: #{tpu_custom_call.1} parent=1 // loop_body
      %s25 = ssub.s32 %s20, 1
      %s26 = ssub.s32 %s20, 2
      %s27 = sadd.s32 %s20, 1
      %s28 = ssub.s32 %s20, %s27
      %p29 = scmp.eq.s32.totalorder %s28, 0
      %s31 = sadd.s32 %s30, 1
      %s32 = scalar_select %p29, %s30, %s31
      %p35 = pneg %p29
      %p36 = scmp.eq.s32.totalorder %s20, 3
      %p37 = por %p35, %p36
      %p38 = scmp.ne.s32.totalorder %s30, %s33
      %p39 = scmp.eq.s32.totalorder %s20, 0
      %p40 = por %p38, %p39
      %p41 = scmp.ne.s32.totalorder %s30, %s33
      %p42 = scmp.eq.s32.totalorder %s25, 3
      %p43 = por %p41, %p42
      %p44 = scmp.ne.s32.totalorder %s33, %s34
      %p45 = scmp.eq.s32.totalorder %s25, 0
      %p46 = por %p44, %p45
      %p47 = scmp.ne.s32.totalorder %s33, %s34
      %p48 = scmp.eq.s32.totalorder %s26, 3
      %p49 = por %p47, %p48
      %p51 = scmp.ne.s32.totalorder %s34, %s50
      %p52 = scmp.eq.s32.totalorder %s26, 0
      %p53 = por %p51, %p52
      %s55 = sadd.s32 %s54, 1
      %p58 = scmp.eq.s32.totalorder %s20, 3
      %p59 = scmp.ne.s32.totalorder %s54, %s56
      %p60 = scmp.eq.s32.totalorder %s20, 0
      %p61 = por %p59, %p60
      %p62 = scmp.ne.s32.totalorder %s54, %s56
      %p63 = scmp.eq.s32.totalorder %s25, 3
      %p64 = por %p62, %p63
      %p65 = scmp.ne.s32.totalorder %s56, %s57
      %p66 = scmp.eq.s32.totalorder %s25, 0
      %p67 = por %p65, %p66
      %p68 = scmp.ne.s32.totalorder %s56, %s57
      %p69 = scmp.eq.s32.totalorder %s26, 3
      %p70 = por %p68, %p69
      %p72 = scmp.ne.s32.totalorder %s57, %s71
      %p73 = scmp.eq.s32.totalorder %s26, 0
      %p74 = por %p72, %p73
      %s76 = sadd.s32 %s75, 1
      %p79 = scmp.eq.s32.totalorder %s20, 3
      %p80 = scmp.ne.s32.totalorder %s75, %s77
      %p81 = scmp.eq.s32.totalorder %s20, 0
      %p82 = por %p80, %p81
      %p83 = scmp.ne.s32.totalorder %s75, %s77
      %p84 = scmp.eq.s32.totalorder %s25, 3
      %p85 = por %p83, %p84
      %p86 = scmp.ne.s32.totalorder %s77, %s78
      %p87 = scmp.eq.s32.totalorder %s25, 0
      %p88 = por %p86, %p87
      %p89 = scmp.ne.s32.totalorder %s77, %s78
      %p90 = scmp.eq.s32.totalorder %s26, 3
      %p91 = por %p89, %p90
      %p93 = scmp.ne.s32.totalorder %s78, %s92
      %p94 = scmp.eq.s32.totalorder %s26, 0
      %p95 = por %p93, %p94
      %s97 = sadd.s32 %s96, 1
      %p100 = scmp.eq.s32.totalorder %s20, 3
      %p101 = scmp.ne.s32.totalorder %s96, %s98
      %p102 = scmp.eq.s32.totalorder %s20, 0
      %p103 = por %p101, %p102
      %p104 = scmp.ne.s32.totalorder %s96, %s98
      %p105 = scmp.eq.s32.totalorder %s25, 3
      %p106 = por %p104, %p105
      %p107 = scmp.ne.s32.totalorder %s98, %s99
      %p108 = scmp.eq.s32.totalorder %s25, 0
      %p109 = por %p107, %p108
      %p110 = scmp.ne.s32.totalorder %s98, %s99
      %p111 = scmp.eq.s32.totalorder %s26, 3
      %p112 = por %p110, %p111
      %p114 = scmp.ne.s32.totalorder %s99, %s113
      %p115 = scmp.eq.s32.totalorder %s26, 0
      %p116 = por %p114, %p115
      %s118 = sadd.s32 %s117, 1
      %p121 = scmp.eq.s32.totalorder %s20, 3
      %p122 = scmp.ne.s32.totalorder %s117, %s119
      %p123 = scmp.eq.s32.totalorder %s20, 0
      %p124 = por %p122, %p123
      %p125 = scmp.ne.s32.totalorder %s117, %s119
      %p126 = scmp.eq.s32.totalorder %s25, 3
      %p127 = por %p125, %p126
      %p128 = scmp.ne.s32.totalorder %s119, %s120
      %p129 = scmp.eq.s32.totalorder %s25, 0
      %p130 = por %p128, %p129
      %p131 = scmp.ne.s32.totalorder %s119, %s120
      %p132 = scmp.eq.s32.totalorder %s26, 3
      %p133 = por %p131, %p132
      %p135 = scmp.ne.s32.totalorder %s120, %s134
      %p136 = scmp.eq.s32.totalorder %s26, 0
      %p137 = por %p135, %p136
      %s139 = sadd.s32 %s138, 1
      %p142 = scmp.eq.s32.totalorder %s20, 3
      %p143 = scmp.ne.s32.totalorder %s138, %s140
      %p144 = scmp.eq.s32.totalorder %s20, 0
      %p145 = por %p143, %p144
      %p146 = scmp.ne.s32.totalorder %s138, %s140
      %p147 = scmp.eq.s32.totalorder %s25, 3
      %p148 = por %p146, %p147
      %p149 = scmp.ne.s32.totalorder %s140, %s141
      %p150 = scmp.eq.s32.totalorder %s25, 0
      %p151 = por %p149, %p150
      %p152 = scmp.ne.s32.totalorder %s140, %s141
      %p153 = scmp.eq.s32.totalorder %s26, 3
      %p154 = por %p152, %p153
      %p156 = scmp.ne.s32.totalorder %s141, %s155
      %p157 = scmp.eq.s32.totalorder %s26, 0
      %p158 = por %p156, %p157
      %s160 = sadd.s32 %s159, 1
      %p163 = scmp.eq.s32.totalorder %s20, 3
      %p164 = scmp.ne.s32.totalorder %s159, %s161
      %p165 = scmp.eq.s32.totalorder %s20, 0
      %p166 = por %p164, %p165
      %p167 = scmp.ne.s32.totalorder %s159, %s161
      %p168 = scmp.eq.s32.totalorder %s25, 3
      %p169 = por %p167, %p168
      %p170 = scmp.ne.s32.totalorder %s161, %s162
      %p171 = scmp.eq.s32.totalorder %s25, 0
      %p172 = por %p170, %p171
      %p173 = scmp.ne.s32.totalorder %s161, %s162
      %p174 = scmp.eq.s32.totalorder %s26, 3
      %p175 = por %p173, %p174
      %p177 = scmp.ne.s32.totalorder %s162, %s176
      %p178 = scmp.eq.s32.totalorder %s26, 0
      %p179 = por %p177, %p178
      %s181 = sadd.s32 %s180, 1
      %p184 = scmp.eq.s32.totalorder %s20, 3
      %p185 = scmp.ne.s32.totalorder %s180, %s182
      %p186 = scmp.eq.s32.totalorder %s20, 0
      %p187 = por %p185, %p186
      %p188 = scmp.ne.s32.totalorder %s180, %s182
      %p189 = scmp.eq.s32.totalorder %s25, 3
      %p190 = por %p188, %p189
      %p191 = scmp.ne.s32.totalorder %s182, %s183
      %p192 = scmp.eq.s32.totalorder %s25, 0
      %p193 = por %p191, %p192
      %p194 = scmp.ne.s32.totalorder %s182, %s183
      %p195 = scmp.eq.s32.totalorder %s26, 3
      %p196 = por %p194, %p195
      %p198 = scmp.ne.s32.totalorder %s183, %s197
      %p199 = scmp.eq.s32.totalorder %s26, 0
      %p200 = por %p198, %p199
      %s202 = sadd.s32 %s201, 1
      %p205 = scmp.eq.s32.totalorder %s20, 3
      %p206 = scmp.ne.s32.totalorder %s201, %s203
      %p207 = scmp.eq.s32.totalorder %s20, 0
      %p208 = por %p206, %p207
      %p209 = scmp.ne.s32.totalorder %s201, %s203
      %p210 = scmp.eq.s32.totalorder %s25, 3
      %p211 = por %p209, %p210
      %p212 = scmp.ne.s32.totalorder %s203, %s204
      %p213 = scmp.eq.s32.totalorder %s25, 0
      %p214 = por %p212, %p213
      %p215 = scmp.ne.s32.totalorder %s203, %s204
      %p216 = scmp.eq.s32.totalorder %s26, 3
      %p217 = por %p215, %p216
      %p219 = scmp.ne.s32.totalorder %s204, %s218
      %p220 = scmp.eq.s32.totalorder %s26, 0
      %p221 = por %p219, %p220
      %s223 = sadd.s32 %s222, 1
      %p226 = scmp.eq.s32.totalorder %s20, 3
      %p227 = scmp.ne.s32.totalorder %s222, %s224
      %p228 = scmp.eq.s32.totalorder %s20, 0
      %p229 = por %p227, %p228
      %p230 = scmp.ne.s32.totalorder %s222, %s224
      %p231 = scmp.eq.s32.totalorder %s25, 3
      %p232 = por %p230, %p231
      %p233 = scmp.ne.s32.totalorder %s224, %s225
      %p234 = scmp.eq.s32.totalorder %s25, 0
      %p235 = por %p233, %p234
      %p236 = scmp.ne.s32.totalorder %s224, %s225
      %p237 = scmp.eq.s32.totalorder %s26, 3
      %p238 = por %p236, %p237
      %p240 = scmp.ne.s32.totalorder %s225, %s239
      %p241 = scmp.eq.s32.totalorder %s26, 0
      %p242 = por %p240, %p241
      %s244 = sadd.s32 %s243, 1
      %p247 = scmp.eq.s32.totalorder %s20, 3
      %p248 = scmp.ne.s32.totalorder %s243, %s245
      %p249 = scmp.eq.s32.totalorder %s20, 0
      %p250 = por %p248, %p249
      %p251 = scmp.ne.s32.totalorder %s243, %s245
      %p252 = scmp.eq.s32.totalorder %s25, 3
      %p253 = por %p251, %p252
      %p254 = scmp.ne.s32.totalorder %s245, %s246
      %p255 = scmp.eq.s32.totalorder %s25, 0
      %p256 = por %p254, %p255
      %p257 = scmp.ne.s32.totalorder %s245, %s246
      %p258 = scmp.eq.s32.totalorder %s26, 3
      %p259 = por %p257, %p258
      %p261 = scmp.ne.s32.totalorder %s246, %s260
      %p262 = scmp.eq.s32.totalorder %s26, 0
      %p263 = por %p261, %p262
      %s264 = ssub.s32 %s20, %s27
      %p265 = scmp.eq.s32.totalorder %s264, 0
      %s267 = sadd.s32 %s266, 1
      %s268 = scalar_select %p265, %s266, %s267
      %p271 = pneg %p265
      %p272 = scmp.eq.s32.totalorder %s20, 3
      %p273 = por %p271, %p272
      %p274 = scmp.ne.s32.totalorder %s266, %s269
      %p275 = scmp.eq.s32.totalorder %s20, 0
      %p276 = por %p274, %p275
      %p277 = scmp.ne.s32.totalorder %s266, %s269
      %p278 = scmp.eq.s32.totalorder %s25, 3
      %p279 = por %p277, %p278
      %p280 = scmp.ne.s32.totalorder %s269, %s270
      %p281 = scmp.eq.s32.totalorder %s25, 0
      %p282 = por %p280, %p281
      %p283 = scmp.ne.s32.totalorder %s269, %s270
      %p284 = scmp.eq.s32.totalorder %s26, 3
      %p285 = por %p283, %p284
      %p287 = scmp.ne.s32.totalorder %s270, %s286
      %p288 = scmp.eq.s32.totalorder %s26, 0
      %p289 = por %p287, %p288
      %p290 = scmp.le.s32.totalorder 1, %s20
      %p291 = scmp.lt.s32.totalorder %s20, 5
      %p292 = pnand %p290, %p291
      %p293 = pneg %p292
      // Predicated region
      $region9: #{tpu_custom_call.1} parent=5 // pred_check
        _
      $region10: #{tpu_custom_call.1} parent=5 // pred_check_branch
        %295 = sbr.rel (%p292) target = $region12
      $region11: #{tpu_custom_call.1} parent=5 // pred_region
        %s296 = ssub.s32 %s20, 1
        // Predicated region
        $region13: #{tpu_custom_call.1} parent=11 // pred_check
          %p297 = pneg %p67
        $region14: #{tpu_custom_call.1} parent=11 // pred_check_branch
          %299 = sbr.rel (%p297) target = $region16
        $region15: #{tpu_custom_call.1} parent=11 // pred_region
          _
        $region16: #{tpu_custom_call.1} parent=11 // pred_fallthru
          _
        // Predicated region
        $region17: #{tpu_custom_call.1} parent=11 // pred_check
          %p300 = pneg %p88
        $region18: #{tpu_custom_call.1} parent=11 // pred_check_branch
          %302 = sbr.rel (%p300) target = $region20
        $region19: #{tpu_custom_call.1} parent=11 // pred_region
          _
        $region20: #{tpu_custom_call.1} parent=11 // pred_fallthru
          _
        // Predicated region
        $region21: #{tpu_custom_call.1} parent=11 // pred_check
          %p303 = pneg %p109
        $region22: #{tpu_custom_call.1} parent=11 // pred_check_branch
          %305 = sbr.rel (%p303) target = $region24
        $region23: #{tpu_custom_call.1} parent=11 // pred_region
          _
        $region24: #{tpu_custom_call.1} parent=11 // pred_fallthru
          _
        // Predicated region
        $region25: #{tpu_custom_call.1} parent=11 // pred_check
          %p306 = pneg %p130
        $region26: #{tpu_custom_call.1} parent=11 // pred_check_branch
          %308 = sbr.rel (%p306) target = $region28
        $region27: #{tpu_custom_call.1} parent=11 // pred_region
          _
        $region28: #{tpu_custom_call.1} parent=11 // pred_fallthru
          _
        // Predicated region
        $region29: #{tpu_custom_call.1} parent=11 // pred_check
          %p309 = pneg %p151
        $region30: #{tpu_custom_call.1} parent=11 // pred_check_branch
          %311 = sbr.rel (%p309) target = $region32
        $region31: #{tpu_custom_call.1} parent=11 // pred_region
          _
        $region32: #{tpu_custom_call.1} parent=11 // pred_fallthru
          _
        // Predicated region
        $region33: #{tpu_custom_call.1} parent=11 // pred_check
          %p312 = pneg %p172
        $region34: #{tpu_custom_call.1} parent=11 // pred_check_branch
          %314 = sbr.rel (%p312) target = $region36
        $region35: #{tpu_custom_call.1} parent=11 // pred_region
          _
        $region36: #{tpu_custom_call.1} parent=11 // pred_fallthru
          _
        // Predicated region
        $region37: #{tpu_custom_call.1} parent=11 // pred_check
          %p315 = pneg %p193
        $region38: #{tpu_custom_call.1} parent=11 // pred_check_branch
          %317 = sbr.rel (%p315) target = $region40
        $region39: #{tpu_custom_call.1} parent=11 // pred_region
          _
        $region40: #{tpu_custom_call.1} parent=11 // pred_fallthru
          _
        // Predicated region
        $region41: #{tpu_custom_call.1} parent=11 // pred_check
          %p318 = pneg %p214
        $region42: #{tpu_custom_call.1} parent=11 // pred_check_branch
          %320 = sbr.rel (%p318) target = $region44
        $region43: #{tpu_custom_call.1} parent=11 // pred_region
          _
        $region44: #{tpu_custom_call.1} parent=11 // pred_fallthru
          _
        // Predicated region
        $region45: #{tpu_custom_call.1} parent=11 // pred_check
          %p321 = pneg %p235
        $region46: #{tpu_custom_call.1} parent=11 // pred_check_branch
          %323 = sbr.rel (%p321) target = $region48
        $region47: #{tpu_custom_call.1} parent=11 // pred_region
          _
        $region48: #{tpu_custom_call.1} parent=11 // pred_fallthru
          _
        // Predicated region
        $region49: #{tpu_custom_call.1} parent=11 // pred_check
          %p324 = pneg %p256
        $region50: #{tpu_custom_call.1} parent=11 // pred_check_branch
          %326 = sbr.rel (%p324) target = $region52
        $region51: #{tpu_custom_call.1} parent=11 // pred_region
          _
        $region52: #{tpu_custom_call.1} parent=11 // pred_fallthru
          _
      $region12: #{tpu_custom_call.1} parent=5 // pred_fallthru
        _
      %p327 = scmp.lt.s32.totalorder %s20, 4
      // Predicated region
      $region53: #{tpu_custom_call.1} parent=5 // pred_check
        %p328 = pneg %p327
      $region54: #{tpu_custom_call.1} parent=5 // pred_check_branch
        %330 = sbr.rel (%p328) target = $region56
      $region55: #{tpu_custom_call.1} parent=5 // pred_region
        // Predicated region
        $region57: #{tpu_custom_call.1} parent=55 // pred_check
          %p331 = pneg %p40
        $region58: #{tpu_custom_call.1} parent=55 // pred_check_branch
          %333 = sbr.rel (%p331) target = $region60
        $region59: #{tpu_custom_call.1} parent=55 // pred_region
          %p334 = scmp.lt.s32.totalorder %s20, 3
          %s335 = scalar_select %p334, %s20, 3
          %s336 = scalar_lea.vmem %s0, %s335
        $region60: #{tpu_custom_call.1} parent=55 // pred_fallthru
          _
      $region56: #{tpu_custom_call.1} parent=5 // pred_fallthru
        _
      %p337 = scmp.le.s32.totalorder 1, %s20
      %p338 = scmp.lt.s32.totalorder %s20, 5
      %p339 = pnand %p337, %p338
      %p340 = pneg %p339
      // Predicated region
      $region61: #{tpu_custom_call.1} parent=5 // pred_check
        _
      $region62: #{tpu_custom_call.1} parent=5 // pred_check_branch
        %342 = sbr.rel (%p339) target = $region64
      $region63: #{tpu_custom_call.1} parent=5 // pred_region
        %s343 = ssub.s32 %s20, 1
        %p344 = scmp.lt.s32.totalorder %s25, 3
        %s345 = scalar_select %p344, %s25, 3
        %s346 = scalar_lea.vmem %s0, %s345
        %p347 = pneg %p46
        %p348 = pneg %p43
        %p349 = pneg %p67
        %p350 = pneg %p64
        %p351 = pneg %p88
        %p352 = pneg %p85
        %p353 = pneg %p109
        %p354 = pneg %p106
        %p355 = pneg %p130
        %p356 = pneg %p127
        %p357 = pneg %p151
        %p358 = pneg %p148
        %p359 = pneg %p172
        %p360 = pneg %p169
        %p361 = pneg %p193
        %p362 = pneg %p190
        %p363 = pneg %p214
        %p364 = pneg %p211
        %p365 = pneg %p235
        %p366 = pneg %p232
        %p367 = pneg %p256
        %p368 = pneg %p253
        %p369 = pneg %p282
        %p370 = pneg %p279
        %s371 = sand.u32 %s269, 1
        %s372 = scalar_lea.sflag [#allocation4], %s371
        %s373 = sand.u32 %s269, 1
        %s374 = smul.addr %s373, 16
        %s375 = scalar_lea.vmem [#allocation3], %s374
        %p376 = scmp.lt.s32.totalorder %s25, 3
        %s377 = scalar_select %p376, %s25, 3
        %s378 = scalar_lea.vmem %s0, %s377
        %v379 = vld [vmem:[%s378] sm:$0x1]
        %v381 = vlaneseq
        %v382 = vshrl.u32 %v381, 7
        %v383 = vsub.s32 0, %v382
        %v384 = vrot.slane %v379, %v383
        %385 = vrot.lane.b32.xlu0 %v384, 2
        %v386 = vpop.permute.xlu0 %385
        %vm388 = vcmask 15360
        %v389 = vsel %vm388, 0.0, %v386
        %390 = vrot.lane.b32.xlu0 %v384, 1
        %v391 = vpop.permute.xlu0 %390
        %vm393 = vcmask 7168
        %v394 = vsel %vm393, 0.0, %v391
        %v395 = vld [vmem:[%s1] sm:$0xff]
        %v396 = vld [vmem:[%s1 + $0x8] sm:$0xff]
        %v397 = vld [vmem:[%s1 + $0x10] sm:$0xff]
        %v398 = vld [vmem:[%s1 + $0x18] sm:$0xff]
        %v399 = vlaneseq
        %v400 = vshrl.u32 %v399, 7
        %v401 = vsub.s32 0, %v400
        %v402 = vrot.slane %v389, %v401
        %404 = vset.pattern.permute.xlu0 0
        %405 = vperm.xlu0 %404, %v395
        %v406 = vpop.permute.xlu0 %405
        %409 = vset.pattern.permute.xlu0 0
        %410 = vperm.xlu0 %409, %v396
        %v411 = vpop.permute.xlu0 %410
        %414 = vset.pattern.permute.xlu0 0
        %415 = vperm.xlu0 %414, %v397
        %v416 = vpop.permute.xlu0 %415
        %419 = vset.pattern.permute.xlu0 0
        %420 = vperm.xlu0 %419, %v398
        %v421 = vpop.permute.xlu0 %420
        %v423 = vmul.f32 %v402, %v406
        %v424 = vmul.f32 %v402, %v411
        %v425 = vmul.f32 %v402, %v416
        %v426 = vmul.f32 %v402, %v421
        %v427 = vlaneseq
        %v428 = vshrl.u32 %v427, 7
        %v429 = vsub.s32 0, %v428
        %v430 = vrot.slane %v394, %v429
        %431 = vset.pattern.permute.xlu0 1
        %432 = vperm.xlu0 %431, %v395
        %v433 = vpop.permute.xlu0 %432
        %435 = vset.pattern.permute.xlu0 1
        %436 = vperm.xlu0 %435, %v396
        %v437 = vpop.permute.xlu0 %436
        %439 = vset.pattern.permute.xlu0 1
        %440 = vperm.xlu0 %439, %v397
        %v441 = vpop.permute.xlu0 %440
        %443 = vset.pattern.permute.xlu0 1
        %444 = vperm.xlu0 %443, %v398
        %v445 = vpop.permute.xlu0 %444
        %v447 = vmul.f32 %v430, %v433
        %v448 = vmul.f32 %v430, %v437
        %v449 = vmul.f32 %v430, %v441
        %v450 = vmul.f32 %v430, %v445
        %v451 = vadd.f32 %v423, %v447
        %v452 = vadd.f32 %v424, %v448
        %v453 = vadd.f32 %v425, %v449
        %v454 = vadd.f32 %v426, %v450
        %v455 = vld [vmem:[%s2] sm:$0xff]
        %v456 = vld [vmem:[%s2 + $0x8] sm:$0xff]
        %v457 = vld [vmem:[%s2 + $0x10] sm:$0xff]
        %v458 = vld [vmem:[%s2 + $0x18] sm:$0xff]
        %460 = vset.pattern.permute.xlu0 0
        %461 = vperm.xlu0 %460, %v455
        %v462 = vpop.permute.xlu0 %461
        %465 = vset.pattern.permute.xlu0 0
        %466 = vperm.xlu0 %465, %v456
        %v467 = vpop.permute.xlu0 %466
        %470 = vset.pattern.permute.xlu0 0
        %471 = vperm.xlu0 %470, %v457
        %v472 = vpop.permute.xlu0 %471
        %475 = vset.pattern.permute.xlu0 0
        %476 = vperm.xlu0 %475, %v458
        %v477 = vpop.permute.xlu0 %476
        %v479 = vadd.f32 %v451, %v462
        %v480 = vadd.f32 %v452, %v467
        %v481 = vadd.f32 %v453, %v472
        %v482 = vadd.f32 %v454, %v477
        %v483 = vmax.f32 %v479, 0.0
        %v484 = vmax.f32 %v480, 0.0
        %v485 = vmax.f32 %v481, 0.0
        %v486 = vmax.f32 %v482, 0.0
        %vm487 = vcmask 31744
        %488 = vst.msk [vmem:[#allocation2] sm:$0xff] %vm487, 0.0
        %489 = vst.msk [vmem:[#allocation2 + $0x8] sm:$0xff] %vm487, 0.0
        %490 = vst.msk [vmem:[#allocation2 + $0x10] sm:$0xff] %vm487, 0.0
        %491 = vst.msk [vmem:[#allocation2 + $0x18] sm:$0xff] %vm487, 0.0
        %496 = vrot.lane.b32.xlu0 %v483, 4
        %v497 = vpop.permute.xlu0 %496
        %498 = vrot.lane.b32.xlu0 %v484, 4
        %v499 = vpop.permute.xlu0 %498
        %500 = vrot.lane.b32.xlu0 %v485, 4
        %v501 = vpop.permute.xlu0 %500
        %502 = vrot.lane.b32.xlu0 %v486, 4
        %v503 = vpop.permute.xlu0 %502
        %vm508 = vcmask 162848
        %509 = vst.msk [vmem:[#allocation2] sm:$0xff] %vm508, %v497
        %510 = vst.msk [vmem:[#allocation2 + $0x8] sm:$0xff] %vm508, %v499
        %511 = vst.msk [vmem:[#allocation2 + $0x10] sm:$0xff] %vm508, %v501
        %512 = vst.msk [vmem:[#allocation2 + $0x18] sm:$0xff] %vm508, %v503
        %v513 = vld [vmem:[#allocation2] sm:$0xff]
        %v514 = vld [vmem:[#allocation2 + $0x8] sm:$0xff]
        %v515 = vld [vmem:[#allocation2 + $0x10] sm:$0xff]
        %v516 = vld [vmem:[#allocation2 + $0x18] sm:$0xff]
        %517 = vrot.lane.b32.xlu0 %v483, 3
        %v518 = vpop.permute.xlu0 %517
        %519 = vrot.lane.b32.xlu0 %v484, 3
        %v520 = vpop.permute.xlu0 %519
        %521 = vrot.lane.b32.xlu0 %v485, 3
        %v522 = vpop.permute.xlu0 %521
        %523 = vrot.lane.b32.xlu0 %v486, 3
        %v524 = vpop.permute.xlu0 %523
        %v525 = vld [vmem:[%s3] sm:$0xff]
        %v526 = vld [vmem:[%s3 + $0x8] sm:$0xff]
        %v527 = vld [vmem:[%s3 + $0x10] sm:$0xff]
        %v528 = vld [vmem:[%s3 + $0x18] sm:$0xff]
        %v529 = vld [vmem:[%s3 + $0x20] sm:$0xff]
        %v530 = vld [vmem:[%s3 + $0x28] sm:$0xff]
        %v531 = vld [vmem:[%s3 + $0x30] sm:$0xff]
        %v532 = vld [vmem:[%s3 + $0x38] sm:$0xff]
        %v533 = vld [vmem:[%s4] sm:$0xff]
        %v534 = vld [vmem:[%s4 + $0x8] sm:$0xff]
        %v535 = vld [vmem:[%s4 + $0x10] sm:$0xff]
        %v536 = vld [vmem:[%s4 + $0x18] sm:$0xff]
        %v537 = vld [vmem:[%s4 + $0x20] sm:$0xff]
        %v538 = vld [vmem:[%s4 + $0x28] sm:$0xff]
        %v539 = vld [vmem:[%s4 + $0x30] sm:$0xff]
        %v540 = vld [vmem:[%s4 + $0x38] sm:$0xff]
        %542 = vset.pattern.permute.xlu0 0
        %543 = vperm.xlu0 %542, %v533
        %v544 = vpop.permute.xlu0 %543
        %547 = vset.pattern.permute.xlu0 0
        %548 = vperm.xlu0 %547, %v534
        %v549 = vpop.permute.xlu0 %548
        %552 = vset.pattern.permute.xlu0 0
        %553 = vperm.xlu0 %552, %v535
        %v554 = vpop.permute.xlu0 %553
        %557 = vset.pattern.permute.xlu0 0
        %558 = vperm.xlu0 %557, %v536
        %v559 = vpop.permute.xlu0 %558
        %562 = vset.pattern.permute.xlu0 0
        %563 = vperm.xlu0 %562, %v537
        %v564 = vpop.permute.xlu0 %563
        %567 = vset.pattern.permute.xlu0 0
        %568 = vperm.xlu0 %567, %v538
        %v569 = vpop.permute.xlu0 %568
        %572 = vset.pattern.permute.xlu0 0
        %573 = vperm.xlu0 %572, %v539
        %v574 = vpop.permute.xlu0 %573
        %577 = vset.pattern.permute.xlu0 0
        %578 = vperm.xlu0 %577, %v540
        %v579 = vpop.permute.xlu0 %578
        %585 = vrot.lane.b32.xlu0 %v513, 125
        %v586 = vpop.permute.xlu0 %585
        %587 = vrot.lane.b32.xlu0 %v514, 125
        %v588 = vpop.permute.xlu0 %587
        %589 = vrot.lane.b32.xlu0 %v515, 125
        %v590 = vpop.permute.xlu0 %589
        %591 = vrot.lane.b32.xlu0 %v516, 125
        %v592 = vpop.permute.xlu0 %591
        %593 = vrot.lane.b32.xlu0 %v518, 125
        %v594 = vpop.permute.xlu0 %593
        %595 = vrot.lane.b32.xlu0 %v520, 125
        %v596 = vpop.permute.xlu0 %595
        %597 = vrot.lane.b32.xlu0 %v522, 125
        %v598 = vpop.permute.xlu0 %597
        %599 = vrot.lane.b32.xlu0 %v524, 125
        %v600 = vpop.permute.xlu0 %599
        %vm609 = vcmask 523264
        %v611 = vsel %vm609, %v525, 0
        %v614 = vsel %vm609, %v526, 0
        %v617 = vsel %vm609, %v527, 0
        %v620 = vsel %vm609, %v528, 0
        %v623 = vsel %vm609, %v529, 0
        %v626 = vsel %vm609, %v530, 0
        %v629 = vsel %vm609, %v531, 0
        %v632 = vsel %vm609, %v532, 0
        %634 = vmatprep.subr.mxu0 0.0
        %635 = vmatpush1.msra.mxu0 %v586
        %636 = vmatprep.subr.mxu0 0.0
        %637 = vmatpush1.msra.mxu0 %v588
        %638 = vmatprep.subr.mxu0 0.0
        %639 = vmatpush1.msra.mxu0 %v590
        %640 = vmatprep.subr.mxu0 0.0
        %641 = vmatpush1.msra.mxu0 %v592
        %642 = vmatprep.subr.mxu0 0.0
        %643 = vmatpush1.msra.mxu0 %v594
        %644 = vmatprep.subr.mxu0 0.0
        %645 = vmatpush1.msra.mxu0 %v596
        %646 = vmatprep.subr.mxu0 0.0
        %647 = vmatpush1.msra.mxu0 %v598
        %648 = vmatprep.subr.mxu0 0.0
        %649 = vmatpush1.msra.mxu0 %v600
        %650 = vmatprep.subr.mxu0 0.0
        %651 = vmatpush1.msra.mxu0 0.0
        %652 = vmatprep.subr.mxu0 0.0
        %653 = vmatpush1.msra.mxu0 0.0
        %654 = vmatprep.subr.mxu0 0.0
        %655 = vmatpush1.msra.mxu0 0.0
        %656 = vmatprep.subr.mxu0 0.0
        %657 = vmatpush1.msra.mxu0 0.0
        %658 = vmatprep.subr.mxu0 0.0
        %659 = vmatpush1.msra.mxu0 0.0
        %660 = vmatprep.subr.mxu0 0.0
        %661 = vmatpush1.msra.mxu0 0.0
        %662 = vmatprep.subr.mxu0 0.0
        %663 = vmatpush1.msra.mxu0 0.0
        %664 = vmatprep.subr.mxu0 0.0
        %665 = vmatpush1.msra.mxu0 0.0
        %666 = vmatprep.subr.mxu0 0.0
        %667 = vmatpush1.msra.mxu0 0.0
        %668 = vmatprep.subr.mxu0 0.0
        %669 = vmatpush1.msra.mxu0 0.0
        %670 = vmatprep.subr.mxu0 0.0
        %671 = vmatpush1.msra.mxu0 0.0
        %672 = vmatprep.subr.mxu0 0.0
        %673 = vmatpush1.msra.mxu0 0.0
        %674 = vmatprep.subr.mxu0 0.0
        %675 = vmatpush1.msra.mxu0 0.0
        %676 = vmatprep.subr.mxu0 0.0
        %677 = vmatpush1.msra.mxu0 0.0
        %678 = vmatprep.subr.mxu0 0.0
        %679 = vmatpush1.msra.mxu0 0.0
        %680 = vmatprep.subr.mxu0 0.0
        %681 = vmatpush1.msra.mxu0 0.0
        %682 = vmatprep.subr.mxu0 0.0
        %683 = vmatpush1.msra.mxu0 0.0
        %684 = vmatprep.subr.mxu0 0.0
        %685 = vmatpush1.msra.mxu0 0.0
        %686 = vmatprep.subr.mxu0 0.0
        %687 = vmatpush1.msra.mxu0 0.0
        %688 = vmatprep.subr.mxu0 0.0
        %689 = vmatpush1.msra.mxu0 0.0
        %690 = vmatprep.subr.mxu0 0.0
        %691 = vmatpush1.msra.mxu0 0.0
        %692 = vmatprep.subr.mxu0 0.0
        %693 = vmatpush1.msra.mxu0 0.0
        %694 = vmatprep.subr.mxu0 0.0
        %695 = vmatpush1.msra.mxu0 0.0
        %696 = vmatprep.subr.mxu0 0.0
        %697 = vmatpush1.msra.mxu0 0.0
        %698 = vmatprep.mubr.f32.mxu0 0.0
        %699 = vmatmul.mubr.f32.gmra.mrb[0].mxu0 %v611
        %v700 = vpop.f32.mrb[0].mxu0
        %v701 = vadd.f32 %v544, %v700
        %v702 = vpop.f32.mrb[0].mxu0
        %703 = vmatprep.mubr.f32.mxu0 0.0
        %704 = vmatmul.mubr.f32.gmra.mrb[0].mxu0 %v614
        %v705 = vpop.f32.mrb[0].mxu0
        %v706 = vadd.f32 %v549, %v705
        %v707 = vpop.f32.mrb[0].mxu0
        %708 = vmatprep.mubr.f32.mxu0 0.0
        %709 = vmatmul.mubr.f32.gmra.mrb[0].mxu0 %v617
        %v710 = vpop.f32.mrb[0].mxu0
        %v711 = vadd.f32 %v554, %v710
        %v712 = vpop.f32.mrb[0].mxu0
        %713 = vmatprep.mubr.f32.mxu0 0.0
        %714 = vmatmul.mubr.f32.gmra.mrb[0].mxu0 %v620
        %v715 = vpop.f32.mrb[0].mxu0
        %v716 = vadd.f32 %v559, %v715
        %v717 = vpop.f32.mrb[0].mxu0
        %718 = vmatprep.mubr.f32.mxu0 0.0
        %719 = vmatmul.mubr.f32.gmra.mrb[0].mxu0 %v623
        %v720 = vpop.f32.mrb[0].mxu0
        %v721 = vadd.f32 %v564, %v720
        %v722 = vpop.f32.mrb[0].mxu0
        %723 = vmatprep.mubr.f32.mxu0 0.0
        %724 = vmatmul.mubr.f32.gmra.mrb[0].mxu0 %v626
        %v725 = vpop.f32.mrb[0].mxu0
        %v726 = vadd.f32 %v569, %v725
        %v727 = vpop.f32.mrb[0].mxu0
        %728 = vmatprep.mubr.f32.mxu0 0.0
        %729 = vmatmul.mubr.f32.gmra.mrb[0].mxu0 %v629
        %v730 = vpop.f32.mrb[0].mxu0
        %v731 = vadd.f32 %v574, %v730
        %v732 = vpop.f32.mrb[0].mxu0
        %733 = vmatprep.mubr.f32.mxu0 0.0
        %734 = vmatmul.mubr.f32.gmra.mrb[0].mxu0 %v632
        %v735 = vpop.f32.mrb[0].mxu0
        %v736 = vadd.f32 %v579, %v735
        %v737 = vpop.f32.mrb[0].mxu0
        %738 = vdwg.mxu0
        %v739 = vxor.u32 %v721, 2147483648
        %v740 = vxor.u32 %v726, 2147483648
        %v741 = vxor.u32 %v731, 2147483648
        %v742 = vxor.u32 %v736, 2147483648
        %v743 = vmul.f32 %v739, 1.442695
        %v744 = vpow.pop %v743
        %v745 = vmul.f32 %v740, 1.442695
        %v746 = vpow.pop %v745
        %v747 = vmul.f32 %v741, 1.442695
        %v748 = vpow.pop %v747
        %v749 = vmul.f32 %v742, 1.442695
        %v750 = vpow.pop %v749
        %v751 = vadd.f32 %v744, 1.0
        %v752 = vadd.f32 %v746, 1.0
        %v753 = vadd.f32 %v748, 1.0
        %v754 = vadd.f32 %v750, 1.0
        %v755 = vrcp.pop %v751
        %v756 = vmul.f32 1.0, %v755
        %v757 = vrcp.pop %v752
        %v758 = vmul.f32 1.0, %v757
        %v759 = vrcp.pop %v753
        %v760 = vmul.f32 1.0, %v759
        %v761 = vrcp.pop %v754
        %v762 = vmul.f32 1.0, %v761
        %v763 = vmul.f32 %v701, %v756
        %v764 = vmul.f32 %v706, %v758
        %v765 = vmul.f32 %v711, %v760
        %v766 = vmul.f32 %v716, %v762
        %v767 = vld [vmem:[%s5] sm:$0xff]
        %v768 = vld [vmem:[%s5 + $0x8] sm:$0xff]
        %v769 = vld [vmem:[%s5 + $0x10] sm:$0xff]
        %v770 = vld [vmem:[%s5 + $0x18] sm:$0xff]
        %v771 = vld [vmem:[%s5 + $0x20] sm:$0xff]
        %v772 = vld [vmem:[%s5 + $0x28] sm:$0xff]
        %v773 = vld [vmem:[%s5 + $0x30] sm:$0xff]
        %v774 = vld [vmem:[%s5 + $0x38] sm:$0xff]
        %v775 = vld [vmem:[%s6] sm:$0xff]
        %v776 = vld [vmem:[%s6 + $0x8] sm:$0xff]
        %v777 = vld [vmem:[%s6 + $0x10] sm:$0xff]
        %v778 = vld [vmem:[%s6 + $0x18] sm:$0xff]
        %v779 = vld [vmem:[%s6 + $0x20] sm:$0xff]
        %v780 = vld [vmem:[%s6 + $0x28] sm:$0xff]
        %v781 = vld [vmem:[%s6 + $0x30] sm:$0xff]
        %v782 = vld [vmem:[%s6 + $0x38] sm:$0xff]
        %784 = vset.pattern.permute.xlu0 0
        %785 = vperm.xlu0 %784, %v775
        %v786 = vpop.permute.xlu0 %785
        %789 = vset.pattern.permute.xlu0 0
        %790 = vperm.xlu0 %789, %v776
        %v791 = vpop.permute.xlu0 %790
        %794 = vset.pattern.permute.xlu0 0
        %795 = vperm.xlu0 %794, %v777
        %v796 = vpop.permute.xlu0 %795
        %799 = vset.pattern.permute.xlu0 0
        %800 = vperm.xlu0 %799, %v778
        %v801 = vpop.permute.xlu0 %800
        %804 = vset.pattern.permute.xlu0 0
        %805 = vperm.xlu0 %804, %v779
        %v806 = vpop.permute.xlu0 %805
        %809 = vset.pattern.permute.xlu0 0
        %810 = vperm.xlu0 %809, %v780
        %v811 = vpop.permute.xlu0 %810
        %814 = vset.pattern.permute.xlu0 0
        %815 = vperm.xlu0 %814, %v781
        %v816 = vpop.permute.xlu0 %815
        %819 = vset.pattern.permute.xlu0 0
        %820 = vperm.xlu0 %819, %v782
        %v821 = vpop.permute.xlu0 %820
        %vm823 = vcmask 261120
        %v825 = vsel %vm823, %v767, 0
        %v828 = vsel %vm823, %v768, 0
        %v831 = vsel %vm823, %v769, 0
        %v834 = vsel %vm823, %v770, 0
        %v837 = vsel %vm823, %v771, 0
        %v840 = vsel %vm823, %v772, 0
        %v843 = vsel %vm823, %v773, 0
        %v846 = vsel %vm823, %v774, 0
        %848 = vmatprep.subr.mxu0 0.0
        %849 = vmatpush1.msra.mxu0 %v763
        %850 = vmatprep.subr.mxu0 0.0
        %851 = vmatpush1.msra.mxu0 %v764
        %852 = vmatprep.subr.mxu0 0.0
        %853 = vmatpush1.msra.mxu0 %v765
        %854 = vmatprep.subr.mxu0 0.0
        %855 = vmatpush1.msra.mxu0 %v766
        %856 = vmatprep.subr.mxu0 0.0
        %857 = vmatpush1.msra.mxu0 0.0
        %858 = vmatprep.subr.mxu0 0.0
        %859 = vmatpush1.msra.mxu0 0.0
        %860 = vmatprep.subr.mxu0 0.0
        %861 = vmatpush1.msra.mxu0 0.0
        %862 = vmatprep.subr.mxu0 0.0
        %863 = vmatpush1.msra.mxu0 0.0
        %864 = vmatprep.subr.mxu0 0.0
        %865 = vmatpush1.msra.mxu0 0.0
        %866 = vmatprep.subr.mxu0 0.0
        %867 = vmatpush1.msra.mxu0 0.0
        %868 = vmatprep.subr.mxu0 0.0
        %869 = vmatpush1.msra.mxu0 0.0
        %870 = vmatprep.subr.mxu0 0.0
        %871 = vmatpush1.msra.mxu0 0.0
        %872 = vmatprep.subr.mxu0 0.0
        %873 = vmatpush1.msra.mxu0 0.0
        %874 = vmatprep.subr.mxu0 0.0
        %875 = vmatpush1.msra.mxu0 0.0
        %876 = vmatprep.subr.mxu0 0.0
        %877 = vmatpush1.msra.mxu0 0.0
        %878 = vmatprep.subr.mxu0 0.0
        %879 = vmatpush1.msra.mxu0 0.0
        %880 = vmatprep.subr.mxu0 0.0
        %881 = vmatpush1.msra.mxu0 0.0
        %882 = vmatprep.subr.mxu0 0.0
        %883 = vmatpush1.msra.mxu0 0.0
        %884 = vmatprep.subr.mxu0 0.0
        %885 = vmatpush1.msra.mxu0 0.0
        %886 = vmatprep.subr.mxu0 0.0
        %887 = vmatpush1.msra.mxu0 0.0
        %888 = vmatprep.subr.mxu0 0.0
        %889 = vmatpush1.msra.mxu0 0.0
        %890 = vmatprep.subr.mxu0 0.0
        %891 = vmatpush1.msra.mxu0 0.0
        %892 = vmatprep.subr.mxu0 0.0
        %893 = vmatpush1.msra.mxu0 0.0
        %894 = vmatprep.subr.mxu0 0.0
        %895 = vmatpush1.msra.mxu0 0.0
        %896 = vmatprep.subr.mxu0 0.0
        %897 = vmatpush1.msra.mxu0 0.0
        %898 = vmatprep.subr.mxu0 0.0
        %899 = vmatpush1.msra.mxu0 0.0
        %900 = vmatprep.subr.mxu0 0.0
        %901 = vmatpush1.msra.mxu0 0.0
        %902 = vmatprep.subr.mxu0 0.0
        %903 = vmatpush1.msra.mxu0 0.0
        %904 = vmatprep.subr.mxu0 0.0
        %905 = vmatpush1.msra.mxu0 0.0
        %906 = vmatprep.subr.mxu0 0.0
        %907 = vmatpush1.msra.mxu0 0.0
        %908 = vmatprep.subr.mxu0 0.0
        %909 = vmatpush1.msra.mxu0 0.0
        %910 = vmatprep.subr.mxu0 0.0
        %911 = vmatpush1.msra.mxu0 0.0
        %912 = vmatprep.mubr.f32.mxu0 0.0
        %913 = vmatmul.mubr.f32.gmra.mrb[0].mxu0 %v825
        %v914 = vpop.f32.mrb[0].mxu0
        %v915 = vadd.f32 %v786, %v914
        %v916 = vpop.f32.mrb[0].mxu0
        %917 = vmatprep.mubr.f32.mxu0 0.0
        %918 = vmatmul.mubr.f32.gmra.mrb[0].mxu0 %v828
        %v919 = vpop.f32.mrb[0].mxu0
        %v920 = vadd.f32 %v791, %v919
        %v921 = vpop.f32.mrb[0].mxu0
        %922 = vmatprep.mubr.f32.mxu0 0.0
        %923 = vmatmul.mubr.f32.gmra.mrb[0].mxu0 %v831
        %v924 = vpop.f32.mrb[0].mxu0
        %v925 = vadd.f32 %v796, %v924
        %v926 = vpop.f32.mrb[0].mxu0
        %927 = vmatprep.mubr.f32.mxu0 0.0
        %928 = vmatmul.mubr.f32.gmra.mrb[0].mxu0 %v834
        %v929 = vpop.f32.mrb[0].mxu0
        %v930 = vadd.f32 %v801, %v929
        %v931 = vpop.f32.mrb[0].mxu0
        %932 = vmatprep.mubr.f32.mxu0 0.0
        %933 = vmatmul.mubr.f32.gmra.mrb[0].mxu0 %v837
        %v934 = vpop.f32.mrb[0].mxu0
        %v935 = vadd.f32 %v806, %v934
        %v936 = vpop.f32.mrb[0].mxu0
        %937 = vmatprep.mubr.f32.mxu0 0.0
        %938 = vmatmul.mubr.f32.gmra.mrb[0].mxu0 %v840
        %v939 = vpop.f32.mrb[0].mxu0
        %v940 = vadd.f32 %v811, %v939
        %v941 = vpop.f32.mrb[0].mxu0
        %942 = vmatprep.mubr.f32.mxu0 0.0
        %943 = vmatmul.mubr.f32.gmra.mrb[0].mxu0 %v843
        %v944 = vpop.f32.mrb[0].mxu0
        %v945 = vadd.f32 %v816, %v944
        %v946 = vpop.f32.mrb[0].mxu0
        %947 = vmatprep.mubr.f32.mxu0 0.0
        %948 = vmatmul.mubr.f32.gmra.mrb[0].mxu0 %v846
        %v949 = vpop.f32.mrb[0].mxu0
        %v950 = vadd.f32 %v821, %v949
        %v951 = vpop.f32.mrb[0].mxu0
        %952 = vdwg.mxu0
        %v953 = vadd.f32 %v915, %v483
        %v954 = vadd.f32 %v920, %v484
        %v955 = vadd.f32 %v925, %v485
        %v956 = vadd.f32 %v930, %v486
        %v957 = vadd.f32 %v935, 0.0
        %v958 = vadd.f32 %v940, 0.0
        %v959 = vadd.f32 %v945, 0.0
        %v960 = vadd.f32 %v950, 0.0
        %965 = vrot.lane.b32.xlu0 %v953, 4
        %v966 = vpop.permute.xlu0 %965
        %967 = vrot.lane.b32.xlu0 %v954, 4
        %v968 = vpop.permute.xlu0 %967
        %969 = vrot.lane.b32.xlu0 %v955, 4
        %v970 = vpop.permute.xlu0 %969
        %971 = vrot.lane.b32.xlu0 %v956, 4
        %v972 = vpop.permute.xlu0 %971
        %977 = vst.msk [vmem:[#allocation2] sm:$0xff] %vm508, %v966
        %978 = vst.msk [vmem:[#allocation2 + $0x8] sm:$0xff] %vm508, %v968
        %979 = vst.msk [vmem:[#allocation2 + $0x10] sm:$0xff] %vm508, %v970
        %980 = vst.msk [vmem:[#allocation2 + $0x18] sm:$0xff] %vm508, %v972
        %v981 = vld [vmem:[#allocation2] sm:$0xff]
        %v982 = vld [vmem:[#allocation2 + $0x8] sm:$0xff]
        %v983 = vld [vmem:[#allocation2 + $0x10] sm:$0xff]
        %v984 = vld [vmem:[#allocation2 + $0x18] sm:$0xff]
        %985 = vrot.lane.b32.xlu0 %v953, 2
        %v986 = vpop.permute.xlu0 %985
        %987 = vrot.lane.b32.xlu0 %v954, 2
        %v988 = vpop.permute.xlu0 %987
        %989 = vrot.lane.b32.xlu0 %v955, 2
        %v990 = vpop.permute.xlu0 %989
        %991 = vrot.lane.b32.xlu0 %v956, 2
        %v992 = vpop.permute.xlu0 %991
        %s993 = scalar_lea.vmem %s3, 64
        %v994 = vld [vmem:[%s993] sm:$0xff]
        %v995 = vld [vmem:[%s993 + $0x8] sm:$0xff]
        %v996 = vld [vmem:[%s993 + $0x10] sm:$0xff]
        %v997 = vld [vmem:[%s993 + $0x18] sm:$0xff]
        %v998 = vld [vmem:[%s993 + $0x20] sm:$0xff]
        %v999 = vld [vmem:[%s993 + $0x28] sm:$0xff]
        %v1000 = vld [vmem:[%s993 + $0x30] sm:$0xff]
        %v1001 = vld [vmem:[%s993 + $0x38] sm:$0xff]
        %s1002 = scalar_lea.vmem %s4, 64
        %v1003 = vld [vmem:[%s1002] sm:$0xff]
        %v1004 = vld [vmem:[%s1002 + $0x8] sm:$0xff]
        %v1005 = vld [vmem:[%s1002 + $0x10] sm:$0xff]
        %v1006 = vld [vmem:[%s1002 + $0x18] sm:$0xff]
        %v1007 = vld [vmem:[%s1002 + $0x20] sm:$0xff]
        %v1008 = vld [vmem:[%s1002 + $0x28] sm:$0xff]
        %v1009 = vld [vmem:[%s1002 + $0x30] sm:$0xff]
        %v1010 = vld [vmem:[%s1002 + $0x38] sm:$0xff]
        %1012 = vset.pattern.permute.xlu0 0
        %1013 = vperm.xlu0 %1012, %v1003
        %v1014 = vpop.permute.xlu0 %1013
        %1017 = vset.pattern.permute.xlu0 0
        %1018 = vperm.xlu0 %1017, %v1004
        %v1019 = vpop.permute.xlu0 %1018
        %1022 = vset.pattern.permute.xlu0 0
        %1023 = vperm.xlu0 %1022, %v1005
        %v1024 = vpop.permute.xlu0 %1023
        %1027 = vset.pattern.permute.xlu0 0
        %1028 = vperm.xlu0 %1027, %v1006
        %v1029 = vpop.permute.xlu0 %1028
        %1032 = vset.pattern.permute.xlu0 0
        %1033 = vperm.xlu0 %1032, %v1007
        %v1034 = vpop.permute.xlu0 %1033
        %1037 = vset.pattern.permute.xlu0 0
        %1038 = vperm.xlu0 %1037, %v1008
        %v1039 = vpop.permute.xlu0 %1038
        %1042 = vset.pattern.permute.xlu0 0
        %1043 = vperm.xlu0 %1042, %v1009
        %v1044 = vpop.permute.xlu0 %1043
        %1047 = vset.pattern.permute.xlu0 0
        %1048 = vperm.xlu0 %1047, %v1010
        %v1049 = vpop.permute.xlu0 %1048
        %1055 = vrot.lane.b32.xlu0 %v981, 126
        %v1056 = vpop.permute.xlu0 %1055
        %1057 = vrot.lane.b32.xlu0 %v982, 126
        %v1058 = vpop.permute.xlu0 %1057
        %1059 = vrot.lane.b32.xlu0 %v983, 126
        %v1060 = vpop.permute.xlu0 %1059
        %1061 = vrot.lane.b32.xlu0 %v984, 126
        %v1062 = vpop.permute.xlu0 %1061
        %1063 = vrot.lane.b32.xlu0 %v986, 126
        %v1064 = vpop.permute.xlu0 %1063
        %1065 = vrot.lane.b32.xlu0 %v988, 126
        %v1066 = vpop.permute.xlu0 %1065
        %1067 = vrot.lane.b32.xlu0 %v990, 126
        %v1068 = vpop.permute.xlu0 %1067
        %1069 = vrot.lane.b32.xlu0 %v992, 126
        %v1070 = vpop.permute.xlu0 %1069
        %v1080 = vsel %vm609, %v994, 0
        %v1083 = vsel %vm609, %v995, 0
        %v1086 = vsel %vm609, %v996, 0
        %v1089 = vsel %vm609, %v997, 0
        %v1092 = vsel %vm609, %v998, 0
        %v1095 = vsel %vm609, %v999, 0
        %v1098 = vsel %vm609, %v1000, 0
        %v1101 = vsel %vm609, %v1001, 0
        %1103 = vmatprep.subr.mxu0 0.0
        %1104 = vmatpush1.msra.mxu0 %v1056
        %1105 = vmatprep.subr.mxu0 0.0
        %1106 = vmatpush1.msra.mxu0 %v1058
        %1107 = vmatprep.subr.mxu0 0.0
        %1108 = vmatpush1.msra.mxu0 %v1060
        %1109 = vmatprep.subr.mxu0 0.0
        %1110 = vmatpush1.msra.mxu0 %v1062
        %1111 = vmatprep.subr.mxu0 0.0
        %1112 = vmatpush1.msra.mxu0 %v1064
        %1113 = vmatprep.subr.mxu0 0.0
        %1114 = vmatpush1.msra.mxu0 %v1066
        %1115 = vmatprep.subr.mxu0 0.0
        %1116 = vmatpush1.msra.mxu0 %v1068
        %1117 = vmatprep.subr.mxu0 0.0
        %1118 = vmatpush1.msra.mxu0 %v1070
        %1119 = vmatprep.subr.mxu0 0.0
        %1120 = vmatpush1.msra.mxu0 0.0
        %1121 = vmatprep.subr.mxu0 0.0
        %1122 = vmatpush1.msra.mxu0 0.0
        %1123 = vmatprep.subr.mxu0 0.0
        %1124 = vmatpush1.msra.mxu0 0.0
        %1125 = vmatprep.subr.mxu0 0.0
        %1126 = vmatpush1.msra.mxu0 0.0
        %1127 = vmatprep.subr.mxu0 0.0
        %1128 = vmatpush1.msra.mxu0 0.0
        %1129 = vmatprep.subr.mxu0 0.0
        %1130 = vmatpush1.msra.mxu0 0.0
        %1131 = vmatprep.subr.mxu0 0.0
        %1132 = vmatpush1.msra.mxu0 0.0
        %1133 = vmatprep.subr.mxu0 0.0
        %1134 = vmatpush1.msra.mxu0 0.0
        %1135 = vmatprep.subr.mxu0 0.0
        %1136 = vmatpush1.msra.mxu0 0.0
        %1137 = vmatprep.subr.mxu0 0.0
        %1138 = vmatpush1.msra.mxu0 0.0
        %1139 = vmatprep.subr.mxu0 0.0
        %1140 = vmatpush1.msra.mxu0 0.0
        %1141 = vmatprep.subr.mxu0 0.0
        %1142 = vmatpush1.msra.mxu0 0.0
        %1143 = vmatprep.subr.mxu0 0.0
        %1144 = vmatpush1.msra.mxu0 0.0
        %1145 = vmatprep.subr.mxu0 0.0
        %1146 = vmatpush1.msra.mxu0 0.0
        %1147 = vmatprep.subr.mxu0 0.0
        %1148 = vmatpush1.msra.mxu0 0.0
        %1149 = vmatprep.subr.mxu0 0.0
        %1150 = vmatpush1.msra.mxu0 0.0
        %1151 = vmatprep.subr.mxu0 0.0
        %1152 = vmatpush1.msra.mxu0 0.0
        %1153 = vmatprep.subr.mxu0 0.0
        %1154 = vmatpush1.msra.mxu0 0.0
        %1155 = vmatprep.subr.mxu0 0.0
        %1156 = vmatpush1.msra.mxu0 0.0
        %1157 = vmatprep.subr.mxu0 0.0
        %1158 = vmatpush1.msra.mxu0 0.0
        %1159 = vmatprep.subr.mxu0 0.0
        %1160 = vmatpush1.msra.mxu0 0.0
        %1161 = vmatprep.subr.mxu0 0.0
        %1162 = vmatpush1.msra.mxu0 0.0
        %1163 = vmatprep.subr.mxu0 0.0
        %1164 = vmatpush1.msra.mxu0 0.0
        %1165 = vmatprep.subr.mxu0 0.0
        %1166 = vmatpush1.msra.mxu0 0.0
        %1167 = vmatprep.mubr.f32.mxu0 0.0
        %1168 = vmatmul.mubr.f32.gmra.mrb[0].mxu0 %v1080
        %v1169 = vpop.f32.mrb[0].mxu0
        %v1170 = vadd.f32 %v1014, %v1169
        %v1171 = vpop.f32.mrb[0].mxu0
        %1172 = vmatprep.mubr.f32.mxu0 0.0
        %1173 = vmatmul.mubr.f32.gmra.mrb[0].mxu0 %v1083
        %v1174 = vpop.f32.mrb[0].mxu0
        %v1175 = vadd.f32 %v1019, %v1174
        %v1176 = vpop.f32.mrb[0].mxu0
        %1177 = vmatprep.mubr.f32.mxu0 0.0
        %1178 = vmatmul.mubr.f32.gmra.mrb[0].mxu0 %v1086
        %v1179 = vpop.f32.mrb[0].mxu0
        %v1180 = vadd.f32 %v1024, %v1179
        %v1181 = vpop.f32.mrb[0].mxu0
        %1182 = vmatprep.mubr.f32.mxu0 0.0
        %1183 = vmatmul.mubr.f32.gmra.mrb[0].mxu0 %v1089
        %v1184 = vpop.f32.mrb[0].mxu0
        %v1185 = vadd.f32 %v1029, %v1184
        %v1186 = vpop.f32.mrb[0].mxu0
        %1187 = vmatprep.mubr.f32.mxu0 0.0
        %1188 = vmatmul.mubr.f32.gmra.mrb[0].mxu0 %v1092
        %v1189 = vpop.f32.mrb[0].mxu0
        %v1190 = vadd.f32 %v1034, %v1189
        %v1191 = vpop.f32.mrb[0].mxu0
        %1192 = vmatprep.mubr.f32.mxu0 0.0
        %1193 = vmatmul.mubr.f32.gmra.mrb[0].mxu0 %v1095
        %v1194 = vpop.f32.mrb[0].mxu0
        %v1195 = vadd.f32 %v1039, %v1194
        %v1196 = vpop.f32.mrb[0].mxu0
        %1197 = vmatprep.mubr.f32.mxu0 0.0
        %1198 = vmatmul.mubr.f32.gmra.mrb[0].mxu0 %v1098
        %v1199 = vpop.f32.mrb[0].mxu0
        %v1200 = vadd.f32 %v1044, %v1199
        %v1201 = vpop.f32.mrb[0].mxu0
        %1202 = vmatprep.mubr.f32.mxu0 0.0
        %1203 = vmatmul.mubr.f32.gmra.mrb[0].mxu0 %v1101
        %v1204 = vpop.f32.mrb[0].mxu0
        %v1205 = vadd.f32 %v1049, %v1204
        %v1206 = vpop.f32.mrb[0].mxu0
        %1207 = vdwg.mxu0
        %v1208 = vxor.u32 %v1190, 2147483648
        %v1209 = vxor.u32 %v1195, 2147483648
        %v1210 = vxor.u32 %v1200, 2147483648
        %v1211 = vxor.u32 %v1205, 2147483648
        %v1212 = vmul.f32 %v1208, 1.442695
        %v1213 = vpow.pop %v1212
        %v1214 = vmul.f32 %v1209, 1.442695
        %v1215 = vpow.pop %v1214
        %v1216 = vmul.f32 %v1210, 1.442695
        %v1217 = vpow.pop %v1216
        %v1218 = vmul.f32 %v1211, 1.442695
        %v1219 = vpow.pop %v1218
        %v1220 = vadd.f32 %v1213, 1.0
        %v1221 = vadd.f32 %v1215, 1.0
        %v1222 = vadd.f32 %v1217, 1.0
        %v1223 = vadd.f32 %v1219, 1.0
        %v1224 = vrcp.pop %v1220
        %v1225 = vmul.f32 1.0, %v1224
        %v1226 = vrcp.pop %v1221
        %v1227 = vmul.f32 1.0, %v1226
        %v1228 = vrcp.pop %v1222
        %v1229 = vmul.f32 1.0, %v1228
        %v1230 = vrcp.pop %v1223
        %v1231 = vmul.f32 1.0, %v1230
        %v1232 = vmul.f32 %v1170, %v1225
        %v1233 = vmul.f32 %v1175, %v1227
        %v1234 = vmul.f32 %v1180, %v1229
        %v1235 = vmul.f32 %v1185, %v1231
        %s1236 = scalar_lea.vmem %s5, 64
        %v1237 = vld [vmem:[%s1236] sm:$0xff]
        %v1238 = vld [vmem:[%s1236 + $0x8] sm:$0xff]
        %v1239 = vld [vmem:[%s1236 + $0x10] sm:$0xff]
        %v1240 = vld [vmem:[%s1236 + $0x18] sm:$0xff]
        %v1241 = vld [vmem:[%s1236 + $0x20] sm:$0xff]
        %v1242 = vld [vmem:[%s1236 + $0x28] sm:$0xff]
        %v1243 = vld [vmem:[%s1236 + $0x30] sm:$0xff]
        %v1244 = vld [vmem:[%s1236 + $0x38] sm:$0xff]
        %s1245 = scalar_lea.vmem %s6, 64
        %v1246 = vld [vmem:[%s1245] sm:$0xff]
        %v1247 = vld [vmem:[%s1245 + $0x8] sm:$0xff]
        %v1248 = vld [vmem:[%s1245 + $0x10] sm:$0xff]
        %v1249 = vld [vmem:[%s1245 + $0x18] sm:$0xff]
        %v1250 = vld [vmem:[%s1245 + $0x20] sm:$0xff]
        %v1251 = vld [vmem:[%s1245 + $0x28] sm:$0xff]
        %v1252 = vld [vmem:[%s1245 + $0x30] sm:$0xff]
        %v1253 = vld [vmem:[%s1245 + $0x38] sm:$0xff]
        %1255 = vset.pattern.permute.xlu0 0
        %1256 = vperm.xlu0 %1255, %v1246
        %v1257 = vpop.permute.xlu0 %1256
        %1260 = vset.pattern.permute.xlu0 0
        %1261 = vperm.xlu0 %1260, %v1247
        %v1262 = vpop.permute.xlu0 %1261
        %1265 = vset.pattern.permute.xlu0 0
        %1266 = vperm.xlu0 %1265, %v1248
        %v1267 = vpop.permute.xlu0 %1266
        %1270 = vset.pattern.permute.xlu0 0
        %1271 = vperm.xlu0 %1270, %v1249
        %v1272 = vpop.permute.xlu0 %1271
        %1275 = vset.pattern.permute.xlu0 0
        %1276 = vperm.xlu0 %1275, %v1250
        %v1277 = vpop.permute.xlu0 %1276
        %1280 = vset.pattern.permute.xlu0 0
        %1281 = vperm.xlu0 %1280, %v1251
        %v1282 = vpop.permute.xlu0 %1281
        %1285 = vset.pattern.permute.xlu0 0
        %1286 = vperm.xlu0 %1285, %v1252
        %v1287 = vpop.permute.xlu0 %1286
        %1290 = vset.pattern.permute.xlu0 0
        %1291 = vperm.xlu0 %1290, %v1253
        %v1292 = vpop.permute.xlu0 %1291
        %v1295 = vsel %vm823, %v1237, 0
        %v1298 = vsel %vm823, %v1238, 0
        %v1301 = vsel %vm823, %v1239, 0
        %v1304 = vsel %vm823, %v1240, 0
        %v1307 = vsel %vm823, %v1241, 0
        %v1310 = vsel %vm823, %v1242, 0
        %v1313 = vsel %vm823, %v1243, 0
        %v1316 = vsel %vm823, %v1244, 0
        %1318 = vmatprep.subr.mxu0 0.0
        %1319 = vmatpush1.msra.mxu0 %v1232
        %1320 = vmatprep.subr.mxu0 0.0
        %1321 = vmatpush1.msra.mxu0 %v1233
        %1322 = vmatprep.subr.mxu0 0.0
        %1323 = vmatpush1.msra.mxu0 %v1234
        %1324 = vmatprep.subr.mxu0 0.0
        %1325 = vmatpush1.msra.mxu0 %v1235
        %1326 = vmatprep.subr.mxu0 0.0
        %1327 = vmatpush1.msra.mxu0 0.0
        %1328 = vmatprep.subr.mxu0 0.0
        %1329 = vmatpush1.msra.mxu0 0.0
        %1330 = vmatprep.subr.mxu0 0.0
        %1331 = vmatpush1.msra.mxu0 0.0
        %1332 = vmatprep.subr.mxu0 0.0
        %1333 = vmatpush1.msra.mxu0 0.0
        %1334 = vmatprep.subr.mxu0 0.0
        %1335 = vmatpush1.msra.mxu0 0.0
        %1336 = vmatprep.subr.mxu0 0.0
        %1337 = vmatpush1.msra.mxu0 0.0
        %1338 = vmatprep.subr.mxu0 0.0
        %1339 = vmatpush1.msra.mxu0 0.0
        %1340 = vmatprep.subr.mxu0 0.0
        %1341 = vmatpush1.msra.mxu0 0.0
        %1342 = vmatprep.subr.mxu0 0.0
        %1343 = vmatpush1.msra.mxu0 0.0
        %1344 = vmatprep.subr.mxu0 0.0
        %1345 = vmatpush1.msra.mxu0 0.0
        %1346 = vmatprep.subr.mxu0 0.0
        %1347 = vmatpush1.msra.mxu0 0.0
        %1348 = vmatprep.subr.mxu0 0.0
        %1349 = vmatpush1.msra.mxu0 0.0
        %1350 = vmatprep.subr.mxu0 0.0
        %1351 = vmatpush1.msra.mxu0 0.0
        %1352 = vmatprep.subr.mxu0 0.0
        %1353 = vmatpush1.msra.mxu0 0.0
        %1354 = vmatprep.subr.mxu0 0.0
        %1355 = vmatpush1.msra.mxu0 0.0
        %1356 = vmatprep.subr.mxu0 0.0
        %1357 = vmatpush1.msra.mxu0 0.0
        %1358 = vmatprep.subr.mxu0 0.0
        %1359 = vmatpush1.msra.mxu0 0.0
        %1360 = vmatprep.subr.mxu0 0.0
        %1361 = vmatpush1.msra.mxu0 0.0
        %1362 = vmatprep.subr.mxu0 0.0
        %1363 = vmatpush1.msra.mxu0 0.0
        %1364 = vmatprep.subr.mxu0 0.0
        %1365 = vmatpush1.msra.mxu0 0.0
        %1366 = vmatprep.subr.mxu0 0.0
        %1367 = vmatpush1.msra.mxu0 0.0
        %1368 = vmatprep.subr.mxu0 0.0
        %1369 = vmatpush1.msra.mxu0 0.0
        %1370 = vmatprep.subr.mxu0 0.0
        %1371 = vmatpush1.msra.mxu0 0.0
        %1372 = vmatprep.subr.mxu0 0.0
        %1373 = vmatpush1.msra.mxu0 0.0
        %1374 = vmatprep.subr.mxu0 0.0
        %1375 = vmatpush1.msra.mxu0 0.0
        %1376 = vmatprep.subr.mxu0 0.0
        %1377 = vmatpush1.msra.mxu0 0.0
        %1378 = vmatprep.subr.mxu0 0.0
        %1379 = vmatpush1.msra.mxu0 0.0
        %1380 = vmatprep.subr.mxu0 0.0
        %1381 = vmatpush1.msra.mxu0 0.0
        %1382 = vmatprep.mubr.f32.mxu0 0.0
        %1383 = vmatmul.mubr.f32.gmra.mrb[0].mxu0 %v1295
        %v1384 = vpop.f32.mrb[0].mxu0
        %v1385 = vadd.f32 %v1257, %v1384
        %v1386 = vpop.f32.mrb[0].mxu0
        %1387 = vmatprep.mubr.f32.mxu0 0.0
        %1388 = vmatmul.mubr.f32.gmra.mrb[0].mxu0 %v1298
        %v1389 = vpop.f32.mrb[0].mxu0
        %v1390 = vadd.f32 %v1262, %v1389
        %v1391 = vpop.f32.mrb[0].mxu0
        %1392 = vmatprep.mubr.f32.mxu0 0.0
        %1393 = vmatmul.mubr.f32.gmra.mrb[0].mxu0 %v1301
        %v1394 = vpop.f32.mrb[0].mxu0
        %v1395 = vadd.f32 %v1267, %v1394
        %v1396 = vpop.f32.mrb[0].mxu0
        %1397 = vmatprep.mubr.f32.mxu0 0.0
        %1398 = vmatmul.mubr.f32.gmra.mrb[0].mxu0 %v1304
        %v1399 = vpop.f32.mrb[0].mxu0
        %v1400 = vadd.f32 %v1272, %v1399
        %v1401 = vpop.f32.mrb[0].mxu0
        %1402 = vmatprep.mubr.f32.mxu0 0.0
        %1403 = vmatmul.mubr.f32.gmra.mrb[0].mxu0 %v1307
        %v1404 = vpop.f32.mrb[0].mxu0
        %v1405 = vadd.f32 %v1277, %v1404
        %v1406 = vpop.f32.mrb[0].mxu0
        %1407 = vmatprep.mubr.f32.mxu0 0.0
        %1408 = vmatmul.mubr.f32.gmra.mrb[0].mxu0 %v1310
        %v1409 = vpop.f32.mrb[0].mxu0
        %v1410 = vadd.f32 %v1282, %v1409
        %v1411 = vpop.f32.mrb[0].mxu0
        %1412 = vmatprep.mubr.f32.mxu0 0.0
        %1413 = vmatmul.mubr.f32.gmra.mrb[0].mxu0 %v1313
        %v1414 = vpop.f32.mrb[0].mxu0
        %v1415 = vadd.f32 %v1287, %v1414
        %v1416 = vpop.f32.mrb[0].mxu0
        %1417 = vmatprep.mubr.f32.mxu0 0.0
        %1418 = vmatmul.mubr.f32.gmra.mrb[0].mxu0 %v1316
        %v1419 = vpop.f32.mrb[0].mxu0
        %v1420 = vadd.f32 %v1292, %v1419
        %v1421 = vpop.f32.mrb[0].mxu0
        %1422 = vdwg.mxu0
        %v1423 = vadd.f32 %v1385, %v953
        %v1424 = vadd.f32 %v1390, %v954
        %v1425 = vadd.f32 %v1395, %v955
        %v1426 = vadd.f32 %v1400, %v956
        %v1427 = vadd.f32 %v957, %v1405
        %v1428 = vadd.f32 %v958, %v1410
        %v1429 = vadd.f32 %v959, %v1415
        %v1430 = vadd.f32 %v960, %v1420
        %1435 = vrot.lane.b32.xlu0 %v1423, 4
        %v1436 = vpop.permute.xlu0 %1435
        %1437 = vrot.lane.b32.xlu0 %v1424, 4
        %v1438 = vpop.permute.xlu0 %1437
        %1439 = vrot.lane.b32.xlu0 %v1425, 4
        %v1440 = vpop.permute.xlu0 %1439
        %1441 = vrot.lane.b32.xlu0 %v1426, 4
        %v1442 = vpop.permute.xlu0 %1441
        %1447 = vst.msk [vmem:[#allocation2] sm:$0xff] %vm508, %v1436
        %1448 = vst.msk [vmem:[#allocation2 + $0x8] sm:$0xff] %vm508, %v1438
        %1449 = vst.msk [vmem:[#allocation2 + $0x10] sm:$0xff] %vm508, %v1440
        %1450 = vst.msk [vmem:[#allocation2 + $0x18] sm:$0xff] %vm508, %v1442
        %v1451 = vld [vmem:[#allocation2] sm:$0xff]
        %v1452 = vld [vmem:[#allocation2 + $0x8] sm:$0xff]
        %v1453 = vld [vmem:[#allocation2 + $0x10] sm:$0xff]
        %v1454 = vld [vmem:[#allocation2 + $0x18] sm:$0xff]
        %s1455 = scalar_lea.vmem %s3, 128
        %v1456 = vld [vmem:[%s1455] sm:$0xff]
        %v1457 = vld [vmem:[%s1455 + $0x8] sm:$0xff]
        %v1458 = vld [vmem:[%s1455 + $0x10] sm:$0xff]
        %v1459 = vld [vmem:[%s1455 + $0x18] sm:$0xff]
        %v1460 = vld [vmem:[%s1455 + $0x20] sm:$0xff]
        %v1461 = vld [vmem:[%s1455 + $0x28] sm:$0xff]
        %v1462 = vld [vmem:[%s1455 + $0x30] sm:$0xff]
        %v1463 = vld [vmem:[%s1455 + $0x38] sm:$0xff]
        %s1464 = scalar_lea.vmem %s4, 128
        %v1465 = vld [vmem:[%s1464] sm:$0xff]
        %v1466 = vld [vmem:[%s1464 + $0x8] sm:$0xff]
        %v1467 = vld [vmem:[%s1464 + $0x10] sm:$0xff]
        %v1468 = vld [vmem:[%s1464 + $0x18] sm:$0xff]
        %v1469 = vld [vmem:[%s1464 + $0x20] sm:$0xff]
        %v1470 = vld [vmem:[%s1464 + $0x28] sm:$0xff]
        %v1471 = vld [vmem:[%s1464 + $0x30] sm:$0xff]
        %v1472 = vld [vmem:[%s1464 + $0x38] sm:$0xff]
        %1474 = vset.pattern.permute.xlu0 0
        %1475 = vperm.xlu0 %1474, %v1465
        %v1476 = vpop.permute.xlu0 %1475
        %1479 = vset.pattern.permute.xlu0 0
        %1480 = vperm.xlu0 %1479, %v1466
        %v1481 = vpop.permute.xlu0 %1480
        %1484 = vset.pattern.permute.xlu0 0
        %1485 = vperm.xlu0 %1484, %v1467
        %v1486 = vpop.permute.xlu0 %1485
        %1489 = vset.pattern.permute.xlu0 0
        %1490 = vperm.xlu0 %1489, %v1468
        %v1491 = vpop.permute.xlu0 %1490
        %1494 = vset.pattern.permute.xlu0 0
        %1495 = vperm.xlu0 %1494, %v1469
        %v1496 = vpop.permute.xlu0 %1495
        %1499 = vset.pattern.permute.xlu0 0
        %1500 = vperm.xlu0 %1499, %v1470
        %v1501 = vpop.permute.xlu0 %1500
        %1504 = vset.pattern.permute.xlu0 0
        %1505 = vperm.xlu0 %1504, %v1471
        %v1506 = vpop.permute.xlu0 %1505
        %1509 = vset.pattern.permute.xlu0 0
        %1510 = vperm.xlu0 %1509, %v1472
        %v1511 = vpop.permute.xlu0 %1510
        %v1514 = vsel %vm609, %v1456, 0
        %v1517 = vsel %vm609, %v1457, 0
        %v1520 = vsel %vm609, %v1458, 0
        %v1523 = vsel %vm609, %v1459, 0
        %v1526 = vsel %vm609, %v1460, 0
        %v1529 = vsel %vm609, %v1461, 0
        %v1532 = vsel %vm609, %v1462, 0
        %v1535 = vsel %vm609, %v1463, 0
        %1537 = vmatprep.subr.mxu0 0.0
        %1538 = vmatpush1.msra.mxu0 %v1451
        %1539 = vmatprep.subr.mxu0 0.0
        %1540 = vmatpush1.msra.mxu0 %v1452
        %1541 = vmatprep.subr.mxu0 0.0
        %1542 = vmatpush1.msra.mxu0 %v1453
        %1543 = vmatprep.subr.mxu0 0.0
        %1544 = vmatpush1.msra.mxu0 %v1454
        %1545 = vmatprep.subr.mxu0 0.0
        %1546 = vmatpush1.msra.mxu0 %v1423
        %1547 = vmatprep.subr.mxu0 0.0
        %1548 = vmatpush1.msra.mxu0 %v1424
        %1549 = vmatprep.subr.mxu0 0.0
        %1550 = vmatpush1.msra.mxu0 %v1425
        %1551 = vmatprep.subr.mxu0 0.0
        %1552 = vmatpush1.msra.mxu0 %v1426
        %1553 = vmatprep.subr.mxu0 0.0
        %1554 = vmatpush1.msra.mxu0 0.0
        %1555 = vmatprep.subr.mxu0 0.0
        %1556 = vmatpush1.msra.mxu0 0.0
        %1557 = vmatprep.subr.mxu0 0.0
        %1558 = vmatpush1.msra.mxu0 0.0
        %1559 = vmatprep.subr.mxu0 0.0
        %1560 = vmatpush1.msra.mxu0 0.0
        %1561 = vmatprep.subr.mxu0 0.0
        %1562 = vmatpush1.msra.mxu0 0.0
        %1563 = vmatprep.subr.mxu0 0.0
        %1564 = vmatpush1.msra.mxu0 0.0
        %1565 = vmatprep.subr.mxu0 0.0
        %1566 = vmatpush1.msra.mxu0 0.0
        %1567 = vmatprep.subr.mxu0 0.0
        %1568 = vmatpush1.msra.mxu0 0.0
        %1569 = vmatprep.subr.mxu0 0.0
        %1570 = vmatpush1.msra.mxu0 0.0
        %1571 = vmatprep.subr.mxu0 0.0
        %1572 = vmatpush1.msra.mxu0 0.0
        %1573 = vmatprep.subr.mxu0 0.0
        %1574 = vmatpush1.msra.mxu0 0.0
        %1575 = vmatprep.subr.mxu0 0.0
        %1576 = vmatpush1.msra.mxu0 0.0
        %1577 = vmatprep.subr.mxu0 0.0
        %1578 = vmatpush1.msra.mxu0 0.0
        %1579 = vmatprep.subr.mxu0 0.0
        %1580 = vmatpush1.msra.mxu0 0.0
        %1581 = vmatprep.subr.mxu0 0.0
        %1582 = vmatpush1.msra.mxu0 0.0
        %1583 = vmatprep.subr.mxu0 0.0
        %1584 = vmatpush1.msra.mxu0 0.0
        %1585 = vmatprep.subr.mxu0 0.0
        %1586 = vmatpush1.msra.mxu0 0.0
        %1587 = vmatprep.subr.mxu0 0.0
        %1588 = vmatpush1.msra.mxu0 0.0
        %1589 = vmatprep.subr.mxu0 0.0
        %1590 = vmatpush1.msra.mxu0 0.0
        %1591 = vmatprep.subr.mxu0 0.0
        %1592 = vmatpush1.msra.mxu0 0.0
        %1593 = vmatprep.subr.mxu0 0.0
        %1594 = vmatpush1.msra.mxu0 0.0
        %1595 = vmatprep.subr.mxu0 0.0
        %1596 = vmatpush1.msra.mxu0 0.0
        %1597 = vmatprep.subr.mxu0 0.0
        %1598 = vmatpush1.msra.mxu0 0.0
        %1599 = vmatprep.subr.mxu0 0.0
        %1600 = vmatpush1.msra.mxu0 0.0
        %1601 = vmatprep.mubr.f32.mxu0 0.0
        %1602 = vmatmul.mubr.f32.gmra.mrb[0].mxu0 %v1514
        %v1603 = vpop.f32.mrb[0].mxu0
        %v1604 = vadd.f32 %v1476, %v1603
        %v1605 = vpop.f32.mrb[0].mxu0
        %1606 = vmatprep.mubr.f32.mxu0 0.0
        %1607 = vmatmul.mubr.f32.gmra.mrb[0].mxu0 %v1517
        %v1608 = vpop.f32.mrb[0].mxu0
        %v1609 = vadd.f32 %v1481, %v1608
        %v1610 = vpop.f32.mrb[0].mxu0
        %1611 = vmatprep.mubr.f32.mxu0 0.0
        %1612 = vmatmul.mubr.f32.gmra.mrb[0].mxu0 %v1520
        %v1613 = vpop.f32.mrb[0].mxu0
        %v1614 = vadd.f32 %v1486, %v1613
        %v1615 = vpop.f32.mrb[0].mxu0
        %1616 = vmatprep.mubr.f32.mxu0 0.0
        %1617 = vmatmul.mubr.f32.gmra.mrb[0].mxu0 %v1523
        %v1618 = vpop.f32.mrb[0].mxu0
        %v1619 = vadd.f32 %v1491, %v1618
        %v1620 = vpop.f32.mrb[0].mxu0
        %1621 = vmatprep.mubr.f32.mxu0 0.0
        %1622 = vmatmul.mubr.f32.gmra.mrb[0].mxu0 %v1526
        %v1623 = vpop.f32.mrb[0].mxu0
        %v1624 = vadd.f32 %v1496, %v1623
        %v1625 = vpop.f32.mrb[0].mxu0
        %1626 = vmatprep.mubr.f32.mxu0 0.0
        %1627 = vmatmul.mubr.f32.gmra.mrb[0].mxu0 %v1529
        %v1628 = vpop.f32.mrb[0].mxu0
        %v1629 = vadd.f32 %v1501, %v1628
        %v1630 = vpop.f32.mrb[0].mxu0
        %1631 = vmatprep.mubr.f32.mxu0 0.0
        %1632 = vmatmul.mubr.f32.gmra.mrb[0].mxu0 %v1532
        %v1633 = vpop.f32.mrb[0].mxu0
        %v1634 = vadd.f32 %v1506, %v1633
        %v1635 = vpop.f32.mrb[0].mxu0
        %1636 = vmatprep.mubr.f32.mxu0 0.0
        %1637 = vmatmul.mubr.f32.gmra.mrb[0].mxu0 %v1535
        %v1638 = vpop.f32.mrb[0].mxu0
        %v1639 = vadd.f32 %v1511, %v1638
        %v1640 = vpop.f32.mrb[0].mxu0
        %1641 = vdwg.mxu0
        %v1642 = vxor.u32 %v1624, 2147483648
        %v1643 = vxor.u32 %v1629, 2147483648
        %v1644 = vxor.u32 %v1634, 2147483648
        %v1645 = vxor.u32 %v1639, 2147483648
        %v1646 = vmul.f32 %v1642, 1.442695
        %v1647 = vpow.pop %v1646
        %v1648 = vmul.f32 %v1643, 1.442695
        %v1649 = vpow.pop %v1648
        %v1650 = vmul.f32 %v1644, 1.442695
        %v1651 = vpow.pop %v1650
        %v1652 = vmul.f32 %v1645, 1.442695
        %v1653 = vpow.pop %v1652
        %v1654 = vadd.f32 %v1647, 1.0
        %v1655 = vadd.f32 %v1649, 1.0
        %v1656 = vadd.f32 %v1651, 1.0
        %v1657 = vadd.f32 %v1653, 1.0
        %v1658 = vrcp.pop %v1654
        %v1659 = vmul.f32 1.0, %v1658
        %v1660 = vrcp.pop %v1655
        %v1661 = vmul.f32 1.0, %v1660
        %v1662 = vrcp.pop %v1656
        %v1663 = vmul.f32 1.0, %v1662
        %v1664 = vrcp.pop %v1657
        %v1665 = vmul.f32 1.0, %v1664
        %v1666 = vmul.f32 %v1604, %v1659
        %v1667 = vmul.f32 %v1609, %v1661
        %v1668 = vmul.f32 %v1614, %v1663
        %v1669 = vmul.f32 %v1619, %v1665
        %s1670 = scalar_lea.vmem %s5, 128
        %v1671 = vld [vmem:[%s1670] sm:$0xff]
        %v1672 = vld [vmem:[%s1670 + $0x8] sm:$0xff]
        %v1673 = vld [vmem:[%s1670 + $0x10] sm:$0xff]
        %v1674 = vld [vmem:[%s1670 + $0x18] sm:$0xff]
        %v1675 = vld [vmem:[%s1670 + $0x20] sm:$0xff]
        %v1676 = vld [vmem:[%s1670 + $0x28] sm:$0xff]
        %v1677 = vld [vmem:[%s1670 + $0x30] sm:$0xff]
        %v1678 = vld [vmem:[%s1670 + $0x38] sm:$0xff]
        %s1679 = scalar_lea.vmem %s6, 128
        %v1680 = vld [vmem:[%s1679] sm:$0xff]
        %v1681 = vld [vmem:[%s1679 + $0x8] sm:$0xff]
        %v1682 = vld [vmem:[%s1679 + $0x10] sm:$0xff]
        %v1683 = vld [vmem:[%s1679 + $0x18] sm:$0xff]
        %v1684 = vld [vmem:[%s1679 + $0x20] sm:$0xff]
        %v1685 = vld [vmem:[%s1679 + $0x28] sm:$0xff]
        %v1686 = vld [vmem:[%s1679 + $0x30] sm:$0xff]
        %v1687 = vld [vmem:[%s1679 + $0x38] sm:$0xff]
        %1689 = vset.pattern.permute.xlu0 0
        %1690 = vperm.xlu0 %1689, %v1680
        %v1691 = vpop.permute.xlu0 %1690
        %1693 = vset.pattern.permute.xlu0 0
        %1694 = vperm.xlu0 %1693, %v1681
        %v1695 = vpop.permute.xlu0 %1694
        %1697 = vset.pattern.permute.xlu0 0
        %1698 = vperm.xlu0 %1697, %v1682
        %v1699 = vpop.permute.xlu0 %1698
        %1701 = vset.pattern.permute.xlu0 0
        %1702 = vperm.xlu0 %1701, %v1683
        %v1703 = vpop.permute.xlu0 %1702
        %1705 = vset.pattern.permute.xlu0 0
        %1706 = vperm.xlu0 %1705, %v1684
        %v1707 = vpop.permute.xlu0 %1706
        %1710 = vset.pattern.permute.xlu0 0
        %1711 = vperm.xlu0 %1710, %v1685
        %v1712 = vpop.permute.xlu0 %1711
        %1715 = vset.pattern.permute.xlu0 0
        %1716 = vperm.xlu0 %1715, %v1686
        %v1717 = vpop.permute.xlu0 %1716
        %1720 = vset.pattern.permute.xlu0 0
        %1721 = vperm.xlu0 %1720, %v1687
        %v1722 = vpop.permute.xlu0 %1721
        %v1725 = vsel %vm823, %v1671, 0
        %v1728 = vsel %vm823, %v1672, 0
        %v1731 = vsel %vm823, %v1673, 0
        %v1734 = vsel %vm823, %v1674, 0
        %v1737 = vsel %vm823, %v1675, 0
        %v1740 = vsel %vm823, %v1676, 0
        %v1743 = vsel %vm823, %v1677, 0
        %v1746 = vsel %vm823, %v1678, 0
        %1748 = vmatprep.subr.mxu0 0.0
        %1749 = vmatpush1.msra.mxu0 %v1666
        %1750 = vmatprep.subr.mxu0 0.0
        %1751 = vmatpush1.msra.mxu0 %v1667
        %1752 = vmatprep.subr.mxu0 0.0
        %1753 = vmatpush1.msra.mxu0 %v1668
        %1754 = vmatprep.subr.mxu0 0.0
        %1755 = vmatpush1.msra.mxu0 %v1669
        %1756 = vmatprep.subr.mxu0 0.0
        %1757 = vmatpush1.msra.mxu0 0.0
        %1758 = vmatprep.subr.mxu0 0.0
        %1759 = vmatpush1.msra.mxu0 0.0
        %1760 = vmatprep.subr.mxu0 0.0
        %1761 = vmatpush1.msra.mxu0 0.0
        %1762 = vmatprep.subr.mxu0 0.0
        %1763 = vmatpush1.msra.mxu0 0.0
        %1764 = vmatprep.subr.mxu0 0.0
        %1765 = vmatpush1.msra.mxu0 0.0
        %1766 = vmatprep.subr.mxu0 0.0
        %1767 = vmatpush1.msra.mxu0 0.0
        %1768 = vmatprep.subr.mxu0 0.0
        %1769 = vmatpush1.msra.mxu0 0.0
        %1770 = vmatprep.subr.mxu0 0.0
        %1771 = vmatpush1.msra.mxu0 0.0
        %1772 = vmatprep.subr.mxu0 0.0
        %1773 = vmatpush1.msra.mxu0 0.0
        %1774 = vmatprep.subr.mxu0 0.0
        %1775 = vmatpush1.msra.mxu0 0.0
        %1776 = vmatprep.subr.mxu0 0.0
        %1777 = vmatpush1.msra.mxu0 0.0
        %1778 = vmatprep.subr.mxu0 0.0
        %1779 = vmatpush1.msra.mxu0 0.0
        %1780 = vmatprep.subr.mxu0 0.0
        %1781 = vmatpush1.msra.mxu0 0.0
        %1782 = vmatprep.subr.mxu0 0.0
        %1783 = vmatpush1.msra.mxu0 0.0
        %1784 = vmatprep.subr.mxu0 0.0
        %1785 = vmatpush1.msra.mxu0 0.0
        %1786 = vmatprep.subr.mxu0 0.0
        %1787 = vmatpush1.msra.mxu0 0.0
        %1788 = vmatprep.subr.mxu0 0.0
        %1789 = vmatpush1.msra.mxu0 0.0
        %1790 = vmatprep.subr.mxu0 0.0
        %1791 = vmatpush1.msra.mxu0 0.0
        %1792 = vmatprep.subr.mxu0 0.0
        %1793 = vmatpush1.msra.mxu0 0.0
        %1794 = vmatprep.subr.mxu0 0.0
        %1795 = vmatpush1.msra.mxu0 0.0
        %1796 = vmatprep.subr.mxu0 0.0
        %1797 = vmatpush1.msra.mxu0 0.0
        %1798 = vmatprep.subr.mxu0 0.0
        %1799 = vmatpush1.msra.mxu0 0.0
        %1800 = vmatprep.subr.mxu0 0.0
        %1801 = vmatpush1.msra.mxu0 0.0
        %1802 = vmatprep.subr.mxu0 0.0
        %1803 = vmatpush1.msra.mxu0 0.0
        %1804 = vmatprep.subr.mxu0 0.0
        %1805 = vmatpush1.msra.mxu0 0.0
        %1806 = vmatprep.subr.mxu0 0.0
        %1807 = vmatpush1.msra.mxu0 0.0
        %1808 = vmatprep.subr.mxu0 0.0
        %1809 = vmatpush1.msra.mxu0 0.0
        %1810 = vmatprep.subr.mxu0 0.0
        %1811 = vmatpush1.msra.mxu0 0.0
        %1812 = vmatprep.mubr.f32.mxu0 0.0
        %1813 = vmatmul.mubr.f32.gmra.mrb[0].mxu0 %v1725
        %v1814 = vpop.f32.mrb[0].mxu0
        %v1815 = vpop.f32.mrb[0].mxu0
        %1816 = vmatprep.mubr.f32.mxu0 0.0
        %1817 = vmatmul.mubr.f32.gmra.mrb[0].mxu0 %v1728
        %v1818 = vpop.f32.mrb[0].mxu0
        %v1819 = vpop.f32.mrb[0].mxu0
        %1820 = vmatprep.mubr.f32.mxu0 0.0
        %1821 = vmatmul.mubr.f32.gmra.mrb[0].mxu0 %v1731
        %v1822 = vpop.f32.mrb[0].mxu0
        %v1823 = vpop.f32.mrb[0].mxu0
        %1824 = vmatprep.mubr.f32.mxu0 0.0
        %1825 = vmatmul.mubr.f32.gmra.mrb[0].mxu0 %v1734
        %v1826 = vpop.f32.mrb[0].mxu0
        %v1827 = vpop.f32.mrb[0].mxu0
        %1828 = vmatprep.mubr.f32.mxu0 0.0
        %1829 = vmatmul.mubr.f32.gmra.mrb[0].mxu0 %v1737
        %v1830 = vpop.f32.mrb[0].mxu0
        %v1831 = vadd.f32 %v1707, %v1830
        %v1832 = vpop.f32.mrb[0].mxu0
        %1833 = vmatprep.mubr.f32.mxu0 0.0
        %1834 = vmatmul.mubr.f32.gmra.mrb[0].mxu0 %v1740
        %v1835 = vpop.f32.mrb[0].mxu0
        %v1836 = vadd.f32 %v1712, %v1835
        %v1837 = vpop.f32.mrb[0].mxu0
        %1838 = vmatprep.mubr.f32.mxu0 0.0
        %1839 = vmatmul.mubr.f32.gmra.mrb[0].mxu0 %v1743
        %v1840 = vpop.f32.mrb[0].mxu0
        %v1841 = vadd.f32 %v1717, %v1840
        %v1842 = vpop.f32.mrb[0].mxu0
        %1843 = vmatprep.mubr.f32.mxu0 0.0
        %1844 = vmatmul.mubr.f32.gmra.mrb[0].mxu0 %v1746
        %v1845 = vpop.f32.mrb[0].mxu0
        %v1846 = vadd.f32 %v1722, %v1845
        %v1847 = vpop.f32.mrb[0].mxu0
        %1848 = vdwg.mxu0
        %v1849 = vadd.f32 %v1427, %v1831
        %v1850 = vadd.f32 %v1428, %v1836
        %v1851 = vadd.f32 %v1429, %v1841
        %v1852 = vadd.f32 %v1430, %v1846
        %v1853 = vmax.f32 %v1849, 0.0
        %v1854 = vmax.f32 %v1850, 0.0
        %v1855 = vmax.f32 %v1851, 0.0
        %v1856 = vmax.f32 %v1852, 0.0
        %v1857 = vld [vmem:[%s7] sm:$0xff]
        %v1858 = vld [vmem:[%s7 + $0x8] sm:$0xff]
        %v1859 = vld [vmem:[%s7 + $0x10] sm:$0xff]
        %v1860 = vld [vmem:[%s7 + $0x18] sm:$0xff]
        %v1861 = vld [vmem:[%s8] sm:$0xff]
        %v1862 = vld [vmem:[%s8 + $0x8] sm:$0xff]
        %v1863 = vld [vmem:[%s8 + $0x10] sm:$0xff]
        %v1864 = vld [vmem:[%s8 + $0x18] sm:$0xff]
        %1866 = vset.pattern.permute.xlu0 0
        %1867 = vperm.xlu0 %1866, %v1861
        %v1868 = vpop.permute.xlu0 %1867
        %1871 = vset.pattern.permute.xlu0 0
        %1872 = vperm.xlu0 %1871, %v1862
        %v1873 = vpop.permute.xlu0 %1872
        %1876 = vset.pattern.permute.xlu0 0
        %1877 = vperm.xlu0 %1876, %v1863
        %v1878 = vpop.permute.xlu0 %1877
        %1881 = vset.pattern.permute.xlu0 0
        %1882 = vperm.xlu0 %1881, %v1864
        %v1883 = vpop.permute.xlu0 %1882
        %v1886 = vsel %vm823, %v1857, 0
        %v1889 = vsel %vm823, %v1858, 0
        %v1892 = vsel %vm823, %v1859, 0
        %v1895 = vsel %vm823, %v1860, 0
        %1897 = vmatprep.subr.mxu0 0.0
        %1898 = vmatpush1.msra.mxu0 %v1853
        %1899 = vmatprep.subr.mxu0 0.0
        %1900 = vmatpush1.msra.mxu0 %v1854
        %1901 = vmatprep.subr.mxu0 0.0
        %1902 = vmatpush1.msra.mxu0 %v1855
        %1903 = vmatprep.subr.mxu0 0.0
        %1904 = vmatpush1.msra.mxu0 %v1856
        %1905 = vmatprep.subr.mxu0 0.0
        %1906 = vmatpush1.msra.mxu0 0.0
        %1907 = vmatprep.subr.mxu0 0.0
        %1908 = vmatpush1.msra.mxu0 0.0
        %1909 = vmatprep.subr.mxu0 0.0
        %1910 = vmatpush1.msra.mxu0 0.0
        %1911 = vmatprep.subr.mxu0 0.0
        %1912 = vmatpush1.msra.mxu0 0.0
        %1913 = vmatprep.subr.mxu0 0.0
        %1914 = vmatpush1.msra.mxu0 0.0
        %1915 = vmatprep.subr.mxu0 0.0
        %1916 = vmatpush1.msra.mxu0 0.0
        %1917 = vmatprep.subr.mxu0 0.0
        %1918 = vmatpush1.msra.mxu0 0.0
        %1919 = vmatprep.subr.mxu0 0.0
        %1920 = vmatpush1.msra.mxu0 0.0
        %1921 = vmatprep.subr.mxu0 0.0
        %1922 = vmatpush1.msra.mxu0 0.0
        %1923 = vmatprep.subr.mxu0 0.0
        %1924 = vmatpush1.msra.mxu0 0.0
        %1925 = vmatprep.subr.mxu0 0.0
        %1926 = vmatpush1.msra.mxu0 0.0
        %1927 = vmatprep.subr.mxu0 0.0
        %1928 = vmatpush1.msra.mxu0 0.0
        %1929 = vmatprep.subr.mxu0 0.0
        %1930 = vmatpush1.msra.mxu0 0.0
        %1931 = vmatprep.subr.mxu0 0.0
        %1932 = vmatpush1.msra.mxu0 0.0
        %1933 = vmatprep.subr.mxu0 0.0
        %1934 = vmatpush1.msra.mxu0 0.0
        %1935 = vmatprep.subr.mxu0 0.0
        %1936 = vmatpush1.msra.mxu0 0.0
        %1937 = vmatprep.subr.mxu0 0.0
        %1938 = vmatpush1.msra.mxu0 0.0
        %1939 = vmatprep.subr.mxu0 0.0
        %1940 = vmatpush1.msra.mxu0 0.0
        %1941 = vmatprep.subr.mxu0 0.0
        %1942 = vmatpush1.msra.mxu0 0.0
        %1943 = vmatprep.subr.mxu0 0.0
        %1944 = vmatpush1.msra.mxu0 0.0
        %1945 = vmatprep.subr.mxu0 0.0
        %1946 = vmatpush1.msra.mxu0 0.0
        %1947 = vmatprep.subr.mxu0 0.0
        %1948 = vmatpush1.msra.mxu0 0.0
        %1949 = vmatprep.subr.mxu0 0.0
        %1950 = vmatpush1.msra.mxu0 0.0
        %1951 = vmatprep.subr.mxu0 0.0
        %1952 = vmatpush1.msra.mxu0 0.0
        %1953 = vmatprep.subr.mxu0 0.0
        %1954 = vmatpush1.msra.mxu0 0.0
        %1955 = vmatprep.subr.mxu0 0.0
        %1956 = vmatpush1.msra.mxu0 0.0
        %1957 = vmatprep.subr.mxu0 0.0
        %1958 = vmatpush1.msra.mxu0 0.0
        %1959 = vmatprep.subr.mxu0 0.0
        %1960 = vmatpush1.msra.mxu0 0.0
        %1961 = vmatprep.mubr.f32.mxu0 0.0
        %1962 = vmatmul.mubr.f32.gmra.mrb[0].mxu0 %v1886
        %v1963 = vpop.f32.mrb[0].mxu0
        %v1964 = vadd.f32 %v1868, %v1963
        %v1965 = vpop.f32.mrb[0].mxu0
        %1966 = vmatprep.mubr.f32.mxu0 0.0
        %1967 = vmatmul.mubr.f32.gmra.mrb[0].mxu0 %v1889
        %v1968 = vpop.f32.mrb[0].mxu0
        %v1969 = vadd.f32 %v1873, %v1968
        %v1970 = vpop.f32.mrb[0].mxu0
        %1971 = vmatprep.mubr.f32.mxu0 0.0
        %1972 = vmatmul.mubr.f32.gmra.mrb[0].mxu0 %v1892
        %v1973 = vpop.f32.mrb[0].mxu0
        %v1974 = vadd.f32 %v1878, %v1973
        %v1975 = vpop.f32.mrb[0].mxu0
        %1976 = vmatprep.mubr.f32.mxu0 0.0
        %1977 = vmatmul.mubr.f32.gmra.mrb[0].mxu0 %v1895
        %v1978 = vpop.f32.mrb[0].mxu0
        %v1979 = vadd.f32 %v1883, %v1978
        %v1980 = vpop.f32.mrb[0].mxu0
        %1981 = vdwg.mxu0
        %v1982 = vmax.f32 %v1964, 0.0
        %v1983 = vmax.f32 %v1969, 0.0
        %v1984 = vmax.f32 %v1974, 0.0
        %v1985 = vmax.f32 %v1979, 0.0
        %v1986 = vld [vmem:[%s9] sm:$0xff]
        %v1987 = vld [vmem:[%s9 + $0x8] sm:$0xff]
        %v1988 = vld [vmem:[%s10] sm:$0xff]
        %v1989 = vld [vmem:[%s10 + $0x8] sm:$0xff]
        %1991 = vset.pattern.permute.xlu0 0
        %1992 = vperm.xlu0 %1991, %v1988
        %v1993 = vpop.permute.xlu0 %1992
        %1996 = vset.pattern.permute.xlu0 0
        %1997 = vperm.xlu0 %1996, %v1989
        %v1998 = vpop.permute.xlu0 %1997
        %v2001 = vsel %vm823, %v1986, 0
        %v2004 = vsel %vm823, %v1987, 0
        %2006 = vmatprep.subr.mxu0 0.0
        %2007 = vmatpush1.msra.mxu0 %v1982
        %2008 = vmatprep.subr.mxu0 0.0
        %2009 = vmatpush1.msra.mxu0 %v1983
        %2010 = vmatprep.subr.mxu0 0.0
        %2011 = vmatpush1.msra.mxu0 %v1984
        %2012 = vmatprep.subr.mxu0 0.0
        %2013 = vmatpush1.msra.mxu0 %v1985
        %2014 = vmatprep.subr.mxu0 0.0
        %2015 = vmatpush1.msra.mxu0 0.0
        %2016 = vmatprep.subr.mxu0 0.0
        %2017 = vmatpush1.msra.mxu0 0.0
        %2018 = vmatprep.subr.mxu0 0.0
        %2019 = vmatpush1.msra.mxu0 0.0
        %2020 = vmatprep.subr.mxu0 0.0
        %2021 = vmatpush1.msra.mxu0 0.0
        %2022 = vmatprep.subr.mxu0 0.0
        %2023 = vmatpush1.msra.mxu0 0.0
        %2024 = vmatprep.subr.mxu0 0.0
        %2025 = vmatpush1.msra.mxu0 0.0
        %2026 = vmatprep.subr.mxu0 0.0
        %2027 = vmatpush1.msra.mxu0 0.0
        %2028 = vmatprep.subr.mxu0 0.0
        %2029 = vmatpush1.msra.mxu0 0.0
        %2030 = vmatprep.subr.mxu0 0.0
        %2031 = vmatpush1.msra.mxu0 0.0
        %2032 = vmatprep.subr.mxu0 0.0
        %2033 = vmatpush1.msra.mxu0 0.0
        %2034 = vmatprep.subr.mxu0 0.0
        %2035 = vmatpush1.msra.mxu0 0.0
        %2036 = vmatprep.subr.mxu0 0.0
        %2037 = vmatpush1.msra.mxu0 0.0
        %2038 = vmatprep.subr.mxu0 0.0
        %2039 = vmatpush1.msra.mxu0 0.0
        %2040 = vmatprep.subr.mxu0 0.0
        %2041 = vmatpush1.msra.mxu0 0.0
        %2042 = vmatprep.subr.mxu0 0.0
        %2043 = vmatpush1.msra.mxu0 0.0
        %2044 = vmatprep.subr.mxu0 0.0
        %2045 = vmatpush1.msra.mxu0 0.0
        %2046 = vmatprep.subr.mxu0 0.0
        %2047 = vmatpush1.msra.mxu0 0.0
        %2048 = vmatprep.subr.mxu0 0.0
        %2049 = vmatpush1.msra.mxu0 0.0
        %2050 = vmatprep.subr.mxu0 0.0
        %2051 = vmatpush1.msra.mxu0 0.0
        %2052 = vmatprep.subr.mxu0 0.0
        %2053 = vmatpush1.msra.mxu0 0.0
        %2054 = vmatprep.subr.mxu0 0.0
        %2055 = vmatpush1.msra.mxu0 0.0
        %2056 = vmatprep.subr.mxu0 0.0
        %2057 = vmatpush1.msra.mxu0 0.0
        %2058 = vmatprep.subr.mxu0 0.0
        %2059 = vmatpush1.msra.mxu0 0.0
        %2060 = vmatprep.subr.mxu0 0.0
        %2061 = vmatpush1.msra.mxu0 0.0
        %2062 = vmatprep.subr.mxu0 0.0
        %2063 = vmatpush1.msra.mxu0 0.0
        %2064 = vmatprep.subr.mxu0 0.0
        %2065 = vmatpush1.msra.mxu0 0.0
        %2066 = vmatprep.subr.mxu0 0.0
        %2067 = vmatpush1.msra.mxu0 0.0
        %2068 = vmatprep.subr.mxu0 0.0
        %2069 = vmatpush1.msra.mxu0 0.0
        %2070 = vmatprep.mubr.f32.mxu0 0.0
        %2071 = vmatmul.mubr.f32.gmra.mrb[0].mxu0 %v2001
        %v2072 = vpop.f32.mrb[0].mxu0
        %v2073 = vadd.f32 %v1993, %v2072
        %v2074 = vpop.f32.mrb[0].mxu0
        %2075 = vmatprep.mubr.f32.mxu0 0.0
        %2076 = vmatmul.mubr.f32.gmra.mrb[0].mxu0 %v2004
        %v2077 = vpop.f32.mrb[0].mxu0
        %v2078 = vadd.f32 %v1998, %v2077
        %v2079 = vpop.f32.mrb[0].mxu0
        %2080 = vdwg.mxu0
        %vm2081 = vcmask 130048
        %2082 = vst.msk [vmem:[%s375] sm:$0xff] %vm2081, %v2073
        %2083 = vst.msk [vmem:[%s375 + $0x8] sm:$0xff] %vm2081, %v2078
        %s2084 = sand.u32 %s269, 1
        %s2085 = scalar_lea.sflag [#allocation4], %s2084
        %s2086 = sand.u32 %s269, 1
        %s2087 = smul.addr %s2086, 16
        %s2088 = scalar_lea.vmem [#allocation3], %s2087
        // Predicated region
        $region65: #{tpu_custom_call.1} parent=63 // pred_check
          %p2089 = pneg %p279
        $region66: #{tpu_custom_call.1} parent=63 // pred_check_branch
          %2091 = sbr.rel (%p2089) target = $region68
        $region67: #{tpu_custom_call.1} parent=63 // pred_region
          %s2093 = ssub.s32 256, 256
          %2094 = vsyncadd %s2085, %s2093
          %s2095 = smul.addr %s25, 2
          %s2096 = smul.addr %s2095, 128
          %s2097 = scalar_lea.hbm %s11, %s2096
          %s2098 = sshll.u32 %s2088, 4
          %s2099 = int_to_ptr.vmem [resolvable:$true] %s2098
          %2104 = dma.vmem_to_hbm [thread:$0]  %s2099, 256, %s2097, %s2085, 128, 128, 8
        $region68: #{tpu_custom_call.1} parent=63 // pred_fallthru
          _
      $region64: #{tpu_custom_call.1} parent=5 // pred_fallthru
        _
      %p2105 = scmp.le.s32.totalorder 2, %s20
      // Predicated region
      $region69: #{tpu_custom_call.1} parent=5 // pred_check
        %p2106 = pneg %p2105
      $region70: #{tpu_custom_call.1} parent=5 // pred_check_branch
        %2108 = sbr.rel (%p2106) target = $region72
      $region71: #{tpu_custom_call.1} parent=5 // pred_region
        %s2109 = ssub.s32 %s20, 2
        // Predicated region
        $region73: #{tpu_custom_call.1} parent=71 // pred_check
          %p2110 = pneg %p285
        $region74: #{tpu_custom_call.1} parent=71 // pred_check_branch
          %2112 = sbr.rel (%p2110) target = $region76
        $region75: #{tpu_custom_call.1} parent=71 // pred_region
          %s2113 = sand.u32 %s270, 1
          %s2114 = scalar_lea.sflag [#allocation4], %s2113
          %s2115 = sand.u32 %s270, 1
          %s2116 = smul.addr %s2115, 16
          %s2117 = scalar_lea.vmem [#allocation3], %s2116
          %2118 = dma.done %s2114, 256
        $region76: #{tpu_custom_call.1} parent=71 // pred_fallthru
          _
      $region72: #{tpu_custom_call.1} parent=5 // pred_fallthru
        _
    $region6: #{tpu_custom_call.1} parent=1 // loop_footer
      %s24 = sadd.s32 1, %s20
    $region7: #{tpu_custom_call.1} parent=1 // loop_footer_branch
      %19 = sbr.rel target = $region3
    $region8: #{tpu_custom_call.1} parent=1 // loop_exit
      _
    %2119 = vsyncpa [#allocation4], 1
    %s2120 = scalar_lea.sflag [#allocation4], 1
    %2121 = vsyncpa %s2120, 1

</llo_original>
